<compile_context>
chip_gen: v6e
topology: v6e:2x2x1
jax: 0.10.0
libtpu: 0.0.40
codegen_flags: <defaults>
</compile_context>

<pallas_src>
from functools import partial

import jax
import jax.numpy as jnp
import numpy as np
from jax.experimental import pallas as pl
from jax.experimental.pallas import tpu as pltpu


def _resident_spec(block_shape, index_map):
    """Grid-invariant operand: constant index_map (fetched once) and, when the
    running Pallas version supports it, a single pipeline buffer so the block
    is not double-buffered in VMEM."""
    buffered = getattr(pl, "Buffered", None)
    if buffered is not None:
        try:
            return pl.BlockSpec(block_shape, index_map, pipeline_mode=buffered(1))
        except TypeError:
            pass
    return pl.BlockSpec(block_shape, index_map)


def _msr_kernel(x_ref, pe_ref, dm_ref,
                wq_ref, wk_ref, wv_ref, wg_ref, wo_ref,
                o_ref, *, num_heads, key_dim, head_dim, shared_mask, eps):
    B, g, d = x_ref.shape            # B groups handled per grid step
    rows = B * g
    mxu_dtype = x_ref.dtype          # native operand dtype for the MXU

    # Flatten the group block to (B*g, d) so the projections see a big M.
    x2 = x_ref[...].reshape(rows, d)
    pe2 = pe_ref[...].reshape(rows, d)
    xpe = (x2.astype(jnp.float32) + pe2.astype(jnp.float32)).astype(mxu_dtype)

    # Projections (MXU matmuls, f32 accumulation).  scaling is pre-folded
    # into wk, so no in-kernel (rows x d) multiply.
    q = jnp.dot(xpe, wq_ref[...], preferred_element_type=jnp.float32)   # (rows, d)
    k = jnp.dot(xpe, wk_ref[...], preferred_element_type=jnp.float32)   # (rows, d)
    v = jnp.dot(x2, wv_ref[...], preferred_element_type=jnp.float32)    # (rows, d)
    gate = jnp.dot(x2, wg_ref[...], preferred_element_type=jnp.float32) # (rows, d) f32

    # Downcast MXU operands once; keep VPU/EUP math in f32 (v5e has no
    # bf16 VPU/EUP, every extra cast is a real f32 pass).
    q3 = q.astype(mxu_dtype).reshape(B, g, d)
    k3 = k.astype(mxu_dtype).reshape(B, g, d)
    v3 = v.astype(mxu_dtype).reshape(B, g, d)

    gated_heads = []
    for h in range(num_heads):
        qh = q3[:, :, h * key_dim:(h + 1) * key_dim]      # (B, g, kd) mxu dtype
        kh = k3[:, :, h * key_dim:(h + 1) * key_dim]      # (B, g, kd)
        vh = v3[:, :, h * head_dim:(h + 1) * head_dim]    # (B, g, hd)
        if shared_mask:
            dmh = dm_ref[h].astype(jnp.float32)[None]     # (1, g, g) -> bcast over B
        else:
            dmh = dm_ref[:, h].astype(jnp.float32)        # (B, g, g)

        # Batched QK^T over the groups in the block; contraction on the last
        # dim of both operands -> no explicit transpose of K.
        qk = jnp.einsum('bqd,bkd->bqk', qh, kh,
                        preferred_element_type=jnp.float32)       # (B, g, g) f32
        qk = qk * dmh

        denom = jnp.maximum(jnp.abs(jnp.sum(qk, axis=-1, keepdims=True)), 1.0)
        qk = qk * pl.reciprocal(denom, approx=False)   # exact: rtol=2e-4 must hold

        oh = jnp.einsum('bqk,bkd->bqd', qk.astype(mxu_dtype), vh,
                        preferred_element_type=jnp.float32)       # (B, g, hd) f32

        # RMSNorm over head_dim (no affine), eps=1e-6, f32 math.
        oh = oh * jax.lax.rsqrt(jnp.mean(oh * oh, axis=-1, keepdims=True) + eps)
        oh = oh.reshape(rows, head_dim)

        # swish gate for this head's columns (f32).
        gate_h = gate[:, h * head_dim:(h + 1) * head_dim]
        gated = (gate_h * jax.nn.sigmoid(gate_h)) * oh
        gated_heads.append(gated.astype(mxu_dtype))

    # Single output projection with full contraction depth K=d (instead of
    # num_heads K=head_dim matmuls + a carried f32 accumulator).
    gated_all = jnp.concatenate(gated_heads, axis=-1)             # (rows, d)
    out = jnp.dot(gated_all, wo_ref[...], preferred_element_type=jnp.float32)
    o_ref[...] = out.reshape(B, g, d).astype(o_ref.dtype)


def prepare_weights(wq, wk, wv, wg, wo, *, num_heads):
    """One-time host-side weight prep (hoist outside the call / jit):
    transpose PyTorch nn.Linear weights to (in, out) layout and fold the
    1/sqrt(key_dim) scaling into the K projection weight."""
    d = wq.shape[1]
    key_dim = d // num_heads
    scaling = float(key_dim) ** -0.5
    return wq.T, wk.T * scaling, wv.T, wg.T, wo.T


def _vmem_limit_bytes(B, g, d, num_heads, x_itemsize, dm_itemsize, shared_mask):
    rows = B * g
    weights = 5 * 2 * d * d * x_itemsize                      # worst case (double-buffered)
    dm_elems = num_heads * g * g if shared_mask else 2 * B * num_heads * g * g
    dm = 2 * dm_elems * dm_itemsize
    io = (2 + 2 + 2) * B * g * d * x_itemsize                 # x, pe, out double-buffered
    interm = rows * d * (3 * x_itemsize + 3 * 4) + 3 * B * g * g * 4
    est = weights + dm + io + interm
    return int(est * 1.5) + (4 << 20)


def multi_scale_retention(x, pe, decay_mask, wq_t, wk_t, wv_t, wg_t, wo_t, *,
                          num_heads, group_block=None, target_rows=128,
                          vmem_limit_bytes=None):
    """Pallas wrapper.

    Weights must come from `prepare_weights` ((in, out) layout, scaling folded
    into wk_t).  `decay_mask` may be (num_heads, g, g) (shared across groups,
    kept resident) or (n_groups, num_heads, g, g) (streamed per block).
    """
    n_g, g, d = x.shape
    key_dim = d // num_heads
    head_dim = d // num_heads

    shared_mask = decay_mask.ndim == 3

    if group_block is None:
        group_block = max(1, min(n_g, max(1, target_rows // max(g, 1))))
        if n_g >= 2:
            # keep >= 2 grid steps so the "parallel" axis can shard across
            # both TensorCores on v7x.
            group_block = min(group_block, n_g // 2)
        group_block = max(group_block, 1)
        while n_g % group_block:
            group_block -= 1
    B = group_block
    grid = (n_g // B,)

    if vmem_limit_bytes is None:
        vmem_limit_bytes = _vmem_limit_bytes(
            B, g, d, num_heads, jnp.dtype(x.dtype).itemsize,
            jnp.dtype(decay_mask.dtype).itemsize, shared_mask)
        cap = 128 << 20
        try:
            cap = int(getattr(pltpu.get_tpu_info(), "vmem_capacity_bytes", cap))
        except Exception:
            pass
        vmem_limit_bytes = max(vmem_limit_bytes, 32 << 20)
        vmem_limit_bytes = min(vmem_limit_bytes, int(cap * 0.9))

    kernel = partial(_msr_kernel, num_heads=num_heads, key_dim=key_dim,
                     head_dim=head_dim, shared_mask=shared_mask, eps=1e-6)

    # Grid-invariant operands: constant index_map + single buffer -> fetched
    # once and kept resident across the whole grid.
    weight_spec = _resident_spec((d, d), lambda i: (0, 0))
    if shared_mask:
        dm_spec = _resident_spec((num_heads, g, g), lambda i: (0, 0, 0))
    else:
        dm_spec = pl.BlockSpec((B, num_heads, g, g), lambda i: (i, 0, 0, 0))

    return pl.pallas_call(
        kernel,
        out_shape=jax.ShapeDtypeStruct((n_g, g, d), x.dtype),
        grid=grid,
        in_specs=[
            pl.BlockSpec((B, g, d), lambda i: (i, 0, 0)),     # x
            pl.BlockSpec((B, g, d), lambda i: (i, 0, 0)),     # pe
            dm_spec,                                          # decay mask
            weight_spec, weight_spec, weight_spec, weight_spec, weight_spec,
        ],
        out_specs=pl.BlockSpec((B, g, d), lambda i: (i, 0, 0)),
        compiler_params=pltpu.CompilerParams(
            dimension_semantics=("parallel",),                # shards groups across TCs (v7x)
            vmem_limit_bytes=int(vmem_limit_bytes)),
    )(x, pe, decay_mask, wq_t, wk_t, wv_t, wg_t, wo_t)


# ---------------- reference (plain JAX) for validation ----------------
def _reference(x, pe, decay_mask, wq, wk, wv, wg, wo, num_heads):
    n_g, g, d = x.shape
    kd = hd = d // num_heads
    scaling = kd ** -0.5
    q = (x + pe) @ wq.T
    k = ((x + pe) @ wk.T) * scaling
    v = x @ wv.T
    gate = x @ wg.T
    q = q.reshape(n_g, g, num_heads, kd).transpose(0, 2, 1, 3)
    k = k.reshape(n_g, g, num_heads, kd).transpose(0, 2, 1, 3)
    v = v.reshape(n_g, g, num_heads, hd).transpose(0, 2, 1, 3)
    qk = jnp.einsum('bhqd,bhkd->bhqk', q, k) * decay_mask
    qk = qk / jnp.maximum(jnp.abs(qk.sum(-1, keepdims=True)), 1.0)
    out = jnp.einsum('bhqk,bhkd->bhqd', qk, v)
    out = out.transpose(0, 2, 1, 3)
    out = out * jax.lax.rsqrt(jnp.mean(out ** 2, -1, keepdims=True) + 1e-6)
    out = out.reshape(n_g, g, d)
    out = jax.nn.silu(gate) * out
    return out @ wo.T


def _xavier_uniform(key, shape, gain):
    fan_out, fan_in = shape
    bound = gain * np.sqrt(6.0 / (fan_in + fan_out))
    return jax.random.uniform(key, shape, jnp.float32, -bound, bound)


if __name__ == "__main__":
    # Small shapes consistent with the module: n_groups=2, group_size=8,
    # embed_dim=32, heads=4.
    n_g, g, d, num_heads = 2, 8, 32, 4

    root = jax.random.PRNGKey(0)
    kx, kpe, kq, kk, kv, kg, ko = jax.random.split(root, 7)

    x = jax.random.normal(kx, (n_g, g, d), jnp.float32)
    pe = jax.random.normal(kpe, (n_g, g, d), jnp.float32)

    # Retention decay mask: per-head lower-triangular decay gamma^(i-j),
    # identical for every group -> pass the shared (h, g, g) form.
    gammas = 1.0 - 2.0 ** (-5.0 - jnp.arange(num_heads, dtype=jnp.float32))
    idx = jnp.arange(g, dtype=jnp.float32)
    diff = idx[:, None] - idx[None, :]                                  # (g, g)
    decay_shared = jnp.where(diff >= 0, gammas[:, None, None] ** diff, 0.0)  # (h, g, g)
    decay_full = jnp.broadcast_to(decay_shared, (n_g, num_heads, g, g))      # (n_g, h, g, g)

    gain = 2.0 ** -2.5
    wq = _xavier_uniform(kq, (d, d), gain)
    wk = _xavier_uniform(kk, (d, d), gain)
    wv = _xavier_uniform(kv, (d, d), gain)
    wg = _xavier_uniform(kg, (d, d), gain)
    wo = _xavier_uniform(ko, (d, d), 1.0)

    # Hoist the PyTorch->matmul layout transposes + K scaling once.
    wq_t, wk_t, wv_t, wg_t, wo_t = prepare_weights(wq, wk, wv, wg, wo,
                                                   num_heads=num_heads)

    ref = _reference(x, pe, decay_full, wq, wk, wv, wg, wo, num_heads)

    # Preferred path: shared (h, g, g) decay mask, kept resident in VMEM.
    out = multi_scale_retention(x, pe, decay_shared,
                                wq_t, wk_t, wv_t, wg_t, wo_t,
                                num_heads=num_heads)
    out = jax.block_until_ready(out)
    np.testing.assert_allclose(np.asarray(out), np.asarray(ref),
                               rtol=2e-4, atol=2e-5)

    # Fallback path: per-group (n_g, h, g, g) decay mask (streamed).
    out4 = multi_scale_retention(x, pe, decay_full,
                                 wq_t, wk_t, wv_t, wg_t, wo_t,
                                 num_heads=num_heads)
    out4 = jax.block_until_ready(out4)
    np.testing.assert_allclose(np.asarray(out4), np.asarray(ref),
                               rtol=2e-4, atol=2e-5)

    print("KERNEL_OK")
</pallas_src>

<mosaic_0001>
module attributes {stable_mosaic.version = 11 : i64} {
  func.func @_msr_kernel(%arg0: i32, %arg1: memref<1x8x32xf32, #tpu.memory_space<vmem>>, %arg2: memref<1x8x32xf32, #tpu.memory_space<vmem>>, %arg3: memref<4x8x8xf32, #tpu.memory_space<vmem>>, %arg4: memref<32x32xf32, #tpu.memory_space<vmem>>, %arg5: memref<32x32xf32, #tpu.memory_space<vmem>>, %arg6: memref<32x32xf32, #tpu.memory_space<vmem>>, %arg7: memref<32x32xf32, #tpu.memory_space<vmem>>, %arg8: memref<32x32xf32, #tpu.memory_space<vmem>>, %arg9: memref<1x8x32xf32, #tpu.memory_space<vmem>>) attributes {dimension_semantics = [#tpu.dimension_semantics<parallel>], iteration_bounds = array<i64: 2>, scalar_prefetch = 0 : i64, scratch_operands = 0 : i64, tpu.core_type = #tpu.core_type<tc>, window_params = [{transform_indices = @transform_0, window_bounds = array<i64: 1, 8, 32>}, {transform_indices = @transform_1, window_bounds = array<i64: 1, 8, 32>}, {pipeline_mode = #tpu.pipeline_mode<synchronous>, transform_indices = @transform_2, window_bounds = array<i64: 4, 8, 8>}, {pipeline_mode = #tpu.pipeline_mode<synchronous>, transform_indices = @transform_3, window_bounds = array<i64: 32, 32>}, {pipeline_mode = #tpu.pipeline_mode<synchronous>, transform_indices = @transform_4, window_bounds = array<i64: 32, 32>}, {pipeline_mode = #tpu.pipeline_mode<synchronous>, transform_indices = @transform_5, window_bounds = array<i64: 32, 32>}, {pipeline_mode = #tpu.pipeline_mode<synchronous>, transform_indices = @transform_6, window_bounds = array<i64: 32, 32>}, {pipeline_mode = #tpu.pipeline_mode<synchronous>, transform_indices = @transform_7, window_bounds = array<i64: 32, 32>}, {transform_indices = @transform_8, window_bounds = array<i64: 1, 8, 32>}]} {
    %c0 = arith.constant 0 : index
    %c0_0 = arith.constant 0 : index
    %c0_1 = arith.constant 0 : index
    %0 = vector.load %arg1[%c0, %c0_0, %c0_1] : memref<1x8x32xf32, #tpu.memory_space<vmem>>, vector<1x8x32xf32>
    %1 = vector.shape_cast %0 : vector<1x8x32xf32> to vector<8x32xf32>
    %c0_2 = arith.constant 0 : index
    %c0_3 = arith.constant 0 : index
    %c0_4 = arith.constant 0 : index
    %2 = vector.load %arg2[%c0_2, %c0_3, %c0_4] : memref<1x8x32xf32, #tpu.memory_space<vmem>>, vector<1x8x32xf32>
    %3 = vector.shape_cast %2 : vector<1x8x32xf32> to vector<8x32xf32>
    %4 = arith.addf %1, %3 : vector<8x32xf32>
    %c0_5 = arith.constant 0 : index
    %c0_6 = arith.constant 0 : index
    %5 = vector.load %arg4[%c0_5, %c0_6] : memref<32x32xf32, #tpu.memory_space<vmem>>, vector<32x32xf32>
    %cst = arith.constant dense<0.000000e+00> : vector<8x32xf32>
    %6 = tpu.matmul %4, %5, %cst {dimension_numbers = #tpu.dot_dimension_numbers<[1], [0], [0], [1], [0, 0, 1, 1], [], []>} : vector<8x32xf32>, vector<32x32xf32>, vector<8x32xf32> -> vector<8x32xf32>
    %c0_7 = arith.constant 0 : index
    %c0_8 = arith.constant 0 : index
    %7 = vector.load %arg5[%c0_7, %c0_8] : memref<32x32xf32, #tpu.memory_space<vmem>>, vector<32x32xf32>
    %cst_9 = arith.constant dense<0.000000e+00> : vector<8x32xf32>
    %8 = tpu.matmul %4, %7, %cst_9 {dimension_numbers = #tpu.dot_dimension_numbers<[1], [0], [0], [1], [0, 0, 1, 1], [], []>} : vector<8x32xf32>, vector<32x32xf32>, vector<8x32xf32> -> vector<8x32xf32>
    %c0_10 = arith.constant 0 : index
    %c0_11 = arith.constant 0 : index
    %9 = vector.load %arg6[%c0_10, %c0_11] : memref<32x32xf32, #tpu.memory_space<vmem>>, vector<32x32xf32>
    %cst_12 = arith.constant dense<0.000000e+00> : vector<8x32xf32>
    %10 = tpu.matmul %1, %9, %cst_12 {dimension_numbers = #tpu.dot_dimension_numbers<[1], [0], [0], [1], [0, 0, 1, 1], [], []>} : vector<8x32xf32>, vector<32x32xf32>, vector<8x32xf32> -> vector<8x32xf32>
    %c0_13 = arith.constant 0 : index
    %c0_14 = arith.constant 0 : index
    %11 = vector.load %arg7[%c0_13, %c0_14] : memref<32x32xf32, #tpu.memory_space<vmem>>, vector<32x32xf32>
    %cst_15 = arith.constant dense<0.000000e+00> : vector<8x32xf32>
    %12 = tpu.matmul %1, %11, %cst_15 {dimension_numbers = #tpu.dot_dimension_numbers<[1], [0], [0], [1], [0, 0, 1, 1], [], []>} : vector<8x32xf32>, vector<32x32xf32>, vector<8x32xf32> -> vector<8x32xf32>
    %13 = vector.shape_cast %6 : vector<8x32xf32> to vector<1x8x32xf32>
    %14 = vector.shape_cast %8 : vector<8x32xf32> to vector<1x8x32xf32>
    %15 = vector.shape_cast %10 : vector<8x32xf32> to vector<1x8x32xf32>
    %16 = vector.extract_strided_slice %13 {offsets = [0, 0, 0], sizes = [1, 8, 8], strides = [1, 1, 1]} : vector<1x8x32xf32> to vector<1x8x8xf32>
    %17 = vector.extract_strided_slice %14 {offsets = [0, 0, 0], sizes = [1, 8, 8], strides = [1, 1, 1]} : vector<1x8x32xf32> to vector<1x8x8xf32>
    %18 = vector.extract_strided_slice %15 {offsets = [0, 0, 0], sizes = [1, 8, 8], strides = [1, 1, 1]} : vector<1x8x32xf32> to vector<1x8x8xf32>
    %c0_16 = arith.constant 0 : index
    %c0_17 = arith.constant 0 : index
    %c0_18 = arith.constant 0 : index
    %19 = vector.load %arg3[%c0_16, %c0_17, %c0_18] : memref<4x8x8xf32, #tpu.memory_space<vmem>>, vector<1x8x8xf32>
    %20 = vector.shape_cast %19 : vector<1x8x8xf32> to vector<8x8xf32>
    %21 = vector.shape_cast %20 : vector<8x8xf32> to vector<1x8x8xf32>
    "tpu.trace_start"() <{level = 10 : i32, message = "bqd,bkd->bqk"}> : () -> ()
    %cst_19 = arith.constant dense<0.000000e+00> : vector<1x8x8xf32>
    %22 = tpu.matmul %16, %17, %cst_19 {dimension_numbers = #tpu.dot_dimension_numbers<[2], [2], [1], [1], [0, 0, 0, 1, 1, 1], [0], [0]>} : vector<1x8x8xf32>, vector<1x8x8xf32>, vector<1x8x8xf32> -> vector<1x8x8xf32>
    "tpu.trace_stop"() : () -> ()
    %23 = arith.mulf %22, %21 : vector<1x8x8xf32>
    %cst_20 = arith.constant dense<0.000000e+00> : vector<1x8xf32>
    %24 = vector.multi_reduction <add>, %23, %cst_20 [2] : vector<1x8x8xf32> to vector<1x8xf32>
    %25 = vector.shape_cast %24 : vector<1x8xf32> to vector<1x8x1xf32>
    %26 = math.absf %25 : vector<1x8x1xf32>
    %cst_21 = arith.constant 1.000000e+00 : f32
    %27 = vector.broadcast %cst_21 : f32 to vector<1x8x1xf32>
    %28 = arith.maximumf %26, %27 : vector<1x8x1xf32>
    %29 = tpu.reciprocal %28 : vector<1x8x1xf32> -> vector<1x8x1xf32>
    %30 = vector.broadcast %29 : vector<1x8x1xf32> to vector<1x8x8xf32>
    %31 = arith.mulf %23, %30 : vector<1x8x8xf32>
    "tpu.trace_start"() <{level = 10 : i32, message = "bqk,bkd->bqd"}> : () -> ()
    %cst_22 = arith.constant dense<0.000000e+00> : vector<1x8x8xf32>
    %32 = tpu.matmul %31, %18, %cst_22 {dimension_numbers = #tpu.dot_dimension_numbers<[2], [1], [1], [2], [0, 0, 0, 1, 1, 2], [0], [0]>} : vector<1x8x8xf32>, vector<1x8x8xf32>, vector<1x8x8xf32> -> vector<1x8x8xf32>
    "tpu.trace_stop"() : () -> ()
    %33 = arith.mulf %32, %32 : vector<1x8x8xf32>
    %cst_23 = arith.constant dense<0.000000e+00> : vector<1x8xf32>
    %34 = vector.multi_reduction <add>, %33, %cst_23 [2] : vector<1x8x8xf32> to vector<1x8xf32>
    %35 = vector.shape_cast %34 : vector<1x8xf32> to vector<1x8x1xf32>
    %cst_24 = arith.constant 8.000000e+00 : f32
    %36 = vector.broadcast %cst_24 : f32 to vector<1x8x1xf32>
    %37 = arith.divf %35, %36 : vector<1x8x1xf32>
    %cst_25 = arith.constant 9.99999997E-7 : f32
    %38 = vector.broadcast %cst_25 : f32 to vector<1x8x1xf32>
    %39 = arith.addf %37, %38 : vector<1x8x1xf32>
    %40 = math.rsqrt %39 : vector<1x8x1xf32>
    %41 = vector.broadcast %40 : vector<1x8x1xf32> to vector<1x8x8xf32>
    %42 = arith.mulf %32, %41 : vector<1x8x8xf32>
    %43 = vector.shape_cast %42 : vector<1x8x8xf32> to vector<8x8xf32>
    %44 = vector.extract_strided_slice %12 {offsets = [0, 0], sizes = [8, 8], strides = [1, 1]} : vector<8x32xf32> to vector<8x8xf32>
    %45 = arith.negf %44 : vector<8x8xf32>
    %46 = math.exp %45 : vector<8x8xf32>
    %cst_26 = arith.constant 1.000000e+00 : f32
    %47 = vector.broadcast %cst_26 : f32 to vector<8x8xf32>
    %48 = arith.addf %47, %46 : vector<8x8xf32>
    %49 = arith.divf %47, %48 : vector<8x8xf32>
    %50 = arith.mulf %44, %49 : vector<8x8xf32>
    %51 = arith.mulf %50, %43 : vector<8x8xf32>
    %52 = vector.extract_strided_slice %13 {offsets = [0, 0, 8], sizes = [1, 8, 8], strides = [1, 1, 1]} : vector<1x8x32xf32> to vector<1x8x8xf32>
    %53 = vector.extract_strided_slice %14 {offsets = [0, 0, 8], sizes = [1, 8, 8], strides = [1, 1, 1]} : vector<1x8x32xf32> to vector<1x8x8xf32>
    %54 = vector.extract_strided_slice %15 {offsets = [0, 0, 8], sizes = [1, 8, 8], strides = [1, 1, 1]} : vector<1x8x32xf32> to vector<1x8x8xf32>
    %c1 = arith.constant 1 : index
    %c0_27 = arith.constant 0 : index
    %c0_28 = arith.constant 0 : index
    %55 = vector.load %arg3[%c1, %c0_27, %c0_28] : memref<4x8x8xf32, #tpu.memory_space<vmem>>, vector<1x8x8xf32>
    %56 = vector.shape_cast %55 : vector<1x8x8xf32> to vector<8x8xf32>
    %57 = vector.shape_cast %56 : vector<8x8xf32> to vector<1x8x8xf32>
    "tpu.trace_start"() <{level = 10 : i32, message = "bqd,bkd->bqk"}> : () -> ()
    %cst_29 = arith.constant dense<0.000000e+00> : vector<1x8x8xf32>
    %58 = tpu.matmul %52, %53, %cst_29 {dimension_numbers = #tpu.dot_dimension_numbers<[2], [2], [1], [1], [0, 0, 0, 1, 1, 1], [0], [0]>} : vector<1x8x8xf32>, vector<1x8x8xf32>, vector<1x8x8xf32> -> vector<1x8x8xf32>
    "tpu.trace_stop"() : () -> ()
    %59 = arith.mulf %58, %57 : vector<1x8x8xf32>
    %cst_30 = arith.constant dense<0.000000e+00> : vector<1x8xf32>
    %60 = vector.multi_reduction <add>, %59, %cst_30 [2] : vector<1x8x8xf32> to vector<1x8xf32>
    %61 = vector.shape_cast %60 : vector<1x8xf32> to vector<1x8x1xf32>
    %62 = math.absf %61 : vector<1x8x1xf32>
    %cst_31 = arith.constant 1.000000e+00 : f32
    %63 = vector.broadcast %cst_31 : f32 to vector<1x8x1xf32>
    %64 = arith.maximumf %62, %63 : vector<1x8x1xf32>
    %65 = tpu.reciprocal %64 : vector<1x8x1xf32> -> vector<1x8x1xf32>
    %66 = vector.broadcast %65 : vector<1x8x1xf32> to vector<1x8x8xf32>
    %67 = arith.mulf %59, %66 : vector<1x8x8xf32>
    "tpu.trace_start"() <{level = 10 : i32, message = "bqk,bkd->bqd"}> : () -> ()
    %cst_32 = arith.constant dense<0.000000e+00> : vector<1x8x8xf32>
    %68 = tpu.matmul %67, %54, %cst_32 {dimension_numbers = #tpu.dot_dimension_numbers<[2], [1], [1], [2], [0, 0, 0, 1, 1, 2], [0], [0]>} : vector<1x8x8xf32>, vector<1x8x8xf32>, vector<1x8x8xf32> -> vector<1x8x8xf32>
    "tpu.trace_stop"() : () -> ()
    %69 = arith.mulf %68, %68 : vector<1x8x8xf32>
    %cst_33 = arith.constant dense<0.000000e+00> : vector<1x8xf32>
    %70 = vector.multi_reduction <add>, %69, %cst_33 [2] : vector<1x8x8xf32> to vector<1x8xf32>
    %71 = vector.shape_cast %70 : vector<1x8xf32> to vector<1x8x1xf32>
    %cst_34 = arith.constant 8.000000e+00 : f32
    %72 = vector.broadcast %cst_34 : f32 to vector<1x8x1xf32>
    %73 = arith.divf %71, %72 : vector<1x8x1xf32>
    %cst_35 = arith.constant 9.99999997E-7 : f32
    %74 = vector.broadcast %cst_35 : f32 to vector<1x8x1xf32>
    %75 = arith.addf %73, %74 : vector<1x8x1xf32>
    %76 = math.rsqrt %75 : vector<1x8x1xf32>
    %77 = vector.broadcast %76 : vector<1x8x1xf32> to vector<1x8x8xf32>
    %78 = arith.mulf %68, %77 : vector<1x8x8xf32>
    %79 = vector.shape_cast %78 : vector<1x8x8xf32> to vector<8x8xf32>
    %80 = vector.extract_strided_slice %12 {offsets = [0, 8], sizes = [8, 8], strides = [1, 1]} : vector<8x32xf32> to vector<8x8xf32>
    %81 = arith.negf %80 : vector<8x8xf32>
    %82 = math.exp %81 : vector<8x8xf32>
    %cst_36 = arith.constant 1.000000e+00 : f32
    %83 = vector.broadcast %cst_36 : f32 to vector<8x8xf32>
    %84 = arith.addf %83, %82 : vector<8x8xf32>
    %85 = arith.divf %83, %84 : vector<8x8xf32>
    %86 = arith.mulf %80, %85 : vector<8x8xf32>
    %87 = arith.mulf %86, %79 : vector<8x8xf32>
    %88 = vector.extract_strided_slice %13 {offsets = [0, 0, 16], sizes = [1, 8, 8], strides = [1, 1, 1]} : vector<1x8x32xf32> to vector<1x8x8xf32>
    %89 = vector.extract_strided_slice %14 {offsets = [0, 0, 16], sizes = [1, 8, 8], strides = [1, 1, 1]} : vector<1x8x32xf32> to vector<1x8x8xf32>
    %90 = vector.extract_strided_slice %15 {offsets = [0, 0, 16], sizes = [1, 8, 8], strides = [1, 1, 1]} : vector<1x8x32xf32> to vector<1x8x8xf32>
    %c2 = arith.constant 2 : index
    %c0_37 = arith.constant 0 : index
    %c0_38 = arith.constant 0 : index
    %91 = vector.load %arg3[%c2, %c0_37, %c0_38] : memref<4x8x8xf32, #tpu.memory_space<vmem>>, vector<1x8x8xf32>
    %92 = vector.shape_cast %91 : vector<1x8x8xf32> to vector<8x8xf32>
    %93 = vector.shape_cast %92 : vector<8x8xf32> to vector<1x8x8xf32>
    "tpu.trace_start"() <{level = 10 : i32, message = "bqd,bkd->bqk"}> : () -> ()
    %cst_39 = arith.constant dense<0.000000e+00> : vector<1x8x8xf32>
    %94 = tpu.matmul %88, %89, %cst_39 {dimension_numbers = #tpu.dot_dimension_numbers<[2], [2], [1], [1], [0, 0, 0, 1, 1, 1], [0], [0]>} : vector<1x8x8xf32>, vector<1x8x8xf32>, vector<1x8x8xf32> -> vector<1x8x8xf32>
    "tpu.trace_stop"() : () -> ()
    %95 = arith.mulf %94, %93 : vector<1x8x8xf32>
    %cst_40 = arith.constant dense<0.000000e+00> : vector<1x8xf32>
    %96 = vector.multi_reduction <add>, %95, %cst_40 [2] : vector<1x8x8xf32> to vector<1x8xf32>
    %97 = vector.shape_cast %96 : vector<1x8xf32> to vector<1x8x1xf32>
    %98 = math.absf %97 : vector<1x8x1xf32>
    %cst_41 = arith.constant 1.000000e+00 : f32
    %99 = vector.broadcast %cst_41 : f32 to vector<1x8x1xf32>
    %100 = arith.maximumf %98, %99 : vector<1x8x1xf32>
    %101 = tpu.reciprocal %100 : vector<1x8x1xf32> -> vector<1x8x1xf32>
    %102 = vector.broadcast %101 : vector<1x8x1xf32> to vector<1x8x8xf32>
    %103 = arith.mulf %95, %102 : vector<1x8x8xf32>
    "tpu.trace_start"() <{level = 10 : i32, message = "bqk,bkd->bqd"}> : () -> ()
    %cst_42 = arith.constant dense<0.000000e+00> : vector<1x8x8xf32>
    %104 = tpu.matmul %103, %90, %cst_42 {dimension_numbers = #tpu.dot_dimension_numbers<[2], [1], [1], [2], [0, 0, 0, 1, 1, 2], [0], [0]>} : vector<1x8x8xf32>, vector<1x8x8xf32>, vector<1x8x8xf32> -> vector<1x8x8xf32>
    "tpu.trace_stop"() : () -> ()
    %105 = arith.mulf %104, %104 : vector<1x8x8xf32>
    %cst_43 = arith.constant dense<0.000000e+00> : vector<1x8xf32>
    %106 = vector.multi_reduction <add>, %105, %cst_43 [2] : vector<1x8x8xf32> to vector<1x8xf32>
    %107 = vector.shape_cast %106 : vector<1x8xf32> to vector<1x8x1xf32>
    %cst_44 = arith.constant 8.000000e+00 : f32
    %108 = vector.broadcast %cst_44 : f32 to vector<1x8x1xf32>
    %109 = arith.divf %107, %108 : vector<1x8x1xf32>
    %cst_45 = arith.constant 9.99999997E-7 : f32
    %110 = vector.broadcast %cst_45 : f32 to vector<1x8x1xf32>
    %111 = arith.addf %109, %110 : vector<1x8x1xf32>
    %112 = math.rsqrt %111 : vector<1x8x1xf32>
    %113 = vector.broadcast %112 : vector<1x8x1xf32> to vector<1x8x8xf32>
    %114 = arith.mulf %104, %113 : vector<1x8x8xf32>
    %115 = vector.shape_cast %114 : vector<1x8x8xf32> to vector<8x8xf32>
    %116 = vector.extract_strided_slice %12 {offsets = [0, 16], sizes = [8, 8], strides = [1, 1]} : vector<8x32xf32> to vector<8x8xf32>
    %117 = arith.negf %116 : vector<8x8xf32>
    %118 = math.exp %117 : vector<8x8xf32>
    %cst_46 = arith.constant 1.000000e+00 : f32
    %119 = vector.broadcast %cst_46 : f32 to vector<8x8xf32>
    %120 = arith.addf %119, %118 : vector<8x8xf32>
    %121 = arith.divf %119, %120 : vector<8x8xf32>
    %122 = arith.mulf %116, %121 : vector<8x8xf32>
    %123 = arith.mulf %122, %115 : vector<8x8xf32>
    %124 = vector.extract_strided_slice %13 {offsets = [0, 0, 24], sizes = [1, 8, 8], strides = [1, 1, 1]} : vector<1x8x32xf32> to vector<1x8x8xf32>
    %125 = vector.extract_strided_slice %14 {offsets = [0, 0, 24], sizes = [1, 8, 8], strides = [1, 1, 1]} : vector<1x8x32xf32> to vector<1x8x8xf32>
    %126 = vector.extract_strided_slice %15 {offsets = [0, 0, 24], sizes = [1, 8, 8], strides = [1, 1, 1]} : vector<1x8x32xf32> to vector<1x8x8xf32>
    %c3 = arith.constant 3 : index
    %c0_47 = arith.constant 0 : index
    %c0_48 = arith.constant 0 : index
    %127 = vector.load %arg3[%c3, %c0_47, %c0_48] : memref<4x8x8xf32, #tpu.memory_space<vmem>>, vector<1x8x8xf32>
    %128 = vector.shape_cast %127 : vector<1x8x8xf32> to vector<8x8xf32>
    %129 = vector.shape_cast %128 : vector<8x8xf32> to vector<1x8x8xf32>
    "tpu.trace_start"() <{level = 10 : i32, message = "bqd,bkd->bqk"}> : () -> ()
    %cst_49 = arith.constant dense<0.000000e+00> : vector<1x8x8xf32>
    %130 = tpu.matmul %124, %125, %cst_49 {dimension_numbers = #tpu.dot_dimension_numbers<[2], [2], [1], [1], [0, 0, 0, 1, 1, 1], [0], [0]>} : vector<1x8x8xf32>, vector<1x8x8xf32>, vector<1x8x8xf32> -> vector<1x8x8xf32>
    "tpu.trace_stop"() : () -> ()
    %131 = arith.mulf %130, %129 : vector<1x8x8xf32>
    %cst_50 = arith.constant dense<0.000000e+00> : vector<1x8xf32>
    %132 = vector.multi_reduction <add>, %131, %cst_50 [2] : vector<1x8x8xf32> to vector<1x8xf32>
    %133 = vector.shape_cast %132 : vector<1x8xf32> to vector<1x8x1xf32>
    %134 = math.absf %133 : vector<1x8x1xf32>
    %cst_51 = arith.constant 1.000000e+00 : f32
    %135 = vector.broadcast %cst_51 : f32 to vector<1x8x1xf32>
    %136 = arith.maximumf %134, %135 : vector<1x8x1xf32>
    %137 = tpu.reciprocal %136 : vector<1x8x1xf32> -> vector<1x8x1xf32>
    %138 = vector.broadcast %137 : vector<1x8x1xf32> to vector<1x8x8xf32>
    %139 = arith.mulf %131, %138 : vector<1x8x8xf32>
    "tpu.trace_start"() <{level = 10 : i32, message = "bqk,bkd->bqd"}> : () -> ()
    %cst_52 = arith.constant dense<0.000000e+00> : vector<1x8x8xf32>
    %140 = tpu.matmul %139, %126, %cst_52 {dimension_numbers = #tpu.dot_dimension_numbers<[2], [1], [1], [2], [0, 0, 0, 1, 1, 2], [0], [0]>} : vector<1x8x8xf32>, vector<1x8x8xf32>, vector<1x8x8xf32> -> vector<1x8x8xf32>
    "tpu.trace_stop"() : () -> ()
    %141 = arith.mulf %140, %140 : vector<1x8x8xf32>
    %cst_53 = arith.constant dense<0.000000e+00> : vector<1x8xf32>
    %142 = vector.multi_reduction <add>, %141, %cst_53 [2] : vector<1x8x8xf32> to vector<1x8xf32>
    %143 = vector.shape_cast %142 : vector<1x8xf32> to vector<1x8x1xf32>
    %cst_54 = arith.constant 8.000000e+00 : f32
    %144 = vector.broadcast %cst_54 : f32 to vector<1x8x1xf32>
    %145 = arith.divf %143, %144 : vector<1x8x1xf32>
    %cst_55 = arith.constant 9.99999997E-7 : f32
    %146 = vector.broadcast %cst_55 : f32 to vector<1x8x1xf32>
    %147 = arith.addf %145, %146 : vector<1x8x1xf32>
    %148 = math.rsqrt %147 : vector<1x8x1xf32>
    %149 = vector.broadcast %148 : vector<1x8x1xf32> to vector<1x8x8xf32>
    %150 = arith.mulf %140, %149 : vector<1x8x8xf32>
    %151 = vector.shape_cast %150 : vector<1x8x8xf32> to vector<8x8xf32>
    %152 = vector.extract_strided_slice %12 {offsets = [0, 24], sizes = [8, 8], strides = [1, 1]} : vector<8x32xf32> to vector<8x8xf32>
    %153 = arith.negf %152 : vector<8x8xf32>
    %154 = math.exp %153 : vector<8x8xf32>
    %cst_56 = arith.constant 1.000000e+00 : f32
    %155 = vector.broadcast %cst_56 : f32 to vector<8x8xf32>
    %156 = arith.addf %155, %154 : vector<8x8xf32>
    %157 = arith.divf %155, %156 : vector<8x8xf32>
    %158 = arith.mulf %152, %157 : vector<8x8xf32>
    %159 = arith.mulf %158, %151 : vector<8x8xf32>
    %160 = tpu.concatenate %51, %87, %123, %159 in 1 : vector<8x8xf32>, vector<8x8xf32>, vector<8x8xf32>, vector<8x8xf32> -> vector<8x32xf32>
    %c0_57 = arith.constant 0 : index
    %c0_58 = arith.constant 0 : index
    %161 = vector.load %arg8[%c0_57, %c0_58] : memref<32x32xf32, #tpu.memory_space<vmem>>, vector<32x32xf32>
    %cst_59 = arith.constant dense<0.000000e+00> : vector<8x32xf32>
    %162 = tpu.matmul %160, %161, %cst_59 {dimension_numbers = #tpu.dot_dimension_numbers<[1], [0], [0], [1], [0, 0, 1, 1], [], []>} : vector<8x32xf32>, vector<32x32xf32>, vector<8x32xf32> -> vector<8x32xf32>
    %163 = vector.shape_cast %162 : vector<8x32xf32> to vector<1x8x32xf32>
    %c0_60 = arith.constant 0 : index
    %c0_61 = arith.constant 0 : index
    %c0_62 = arith.constant 0 : index
    %164 = vector.load %arg9[%c0_60, %c0_61, %c0_62] : memref<1x8x32xf32, #tpu.memory_space<vmem>>, vector<1x8x32xf32>
    tpu.vector_store %arg9[%c0_60, %c0_61, %c0_62], %163 {strides = array<i32>} : memref<1x8x32xf32, #tpu.memory_space<vmem>>, vector<1x8x32xf32>,
    return
  }
  func.func @transform_0(%arg0: i32) -> (i32, i32, i32) {
    %c0_i32 = arith.constant 0 : i32
    %c0_i32_0 = arith.constant 0 : i32
    %c0_i32_1 = arith.constant 0 : i32
    return %arg0, %c0_i32, %c0_i32_0 : i32, i32, i32
  }
  func.func @transform_1(%arg0: i32) -> (i32, i32, i32) {
    %c0_i32 = arith.constant 0 : i32
    %c0_i32_0 = arith.constant 0 : i32
    %c0_i32_1 = arith.constant 0 : i32
    return %arg0, %c0_i32, %c0_i32_0 : i32, i32, i32
  }
  func.func @transform_2(%arg0: i32) -> (i32, i32, i32) {
    %c0_i32 = arith.constant 0 : i32
    %c0_i32_0 = arith.constant 0 : i32
    %c0_i32_1 = arith.constant 0 : i32
    %c0_i32_2 = arith.constant 0 : i32
    return %c0_i32, %c0_i32_0, %c0_i32_1 : i32, i32, i32
  }
  func.func @transform_3(%arg0: i32) -> (i32, i32) {
    %c0_i32 = arith.constant 0 : i32
    %c0_i32_0 = arith.constant 0 : i32
    %c0_i32_1 = arith.constant 0 : i32
    return %c0_i32, %c0_i32_0 : i32, i32
  }
  func.func @transform_4(%arg0: i32) -> (i32, i32) {
    %c0_i32 = arith.constant 0 : i32
    %c0_i32_0 = arith.constant 0 : i32
    %c0_i32_1 = arith.constant 0 : i32
    return %c0_i32, %c0_i32_0 : i32, i32
  }
  func.func @transform_5(%arg0: i32) -> (i32, i32) {
    %c0_i32 = arith.constant 0 : i32
    %c0_i32_0 = arith.constant 0 : i32
    %c0_i32_1 = arith.constant 0 : i32
    return %c0_i32, %c0_i32_0 : i32, i32
  }
  func.func @transform_6(%arg0: i32) -> (i32, i32) {
    %c0_i32 = arith.constant 0 : i32
    %c0_i32_0 = arith.constant 0 : i32
    %c0_i32_1 = arith.constant 0 : i32
    return %c0_i32, %c0_i32_0 : i32, i32
  }
  func.func @transform_7(%arg0: i32) -> (i32, i32) {
    %c0_i32 = arith.constant 0 : i32
    %c0_i32_0 = arith.constant 0 : i32
    %c0_i32_1 = arith.constant 0 : i32
    return %c0_i32, %c0_i32_0 : i32, i32
  }
  func.func @transform_8(%arg0: i32) -> (i32, i32, i32) {
    %c0_i32 = arith.constant 0 : i32
    %c0_i32_0 = arith.constant 0 : i32
    %c0_i32_1 = arith.constant 0 : i32
    return %arg0, %c0_i32, %c0_i32_0 : i32, i32, i32
  }
}

</mosaic_0001>

<llo_original>
// kernel: tpu_custom_call.1
$region0: #{tpu_custom_call.1}
  #allocation0 [shape = 'u32[]', space=smem, size = 0x4, offset = 0x4, fixed_abs, tag = 'smem constant byte address 0x4 - core index']
  #allocation1 [shape = 'u32[144,128]{1,0:T(1,128)}', space=vmem, size = 0x12000, scoped, tag = 'internal scratch']
  %s0 = inlined_call_operand.hbm [shape: f32[2,8,32], index: 0, kind: input, shape index: {}]
  %s1 = inlined_call_operand.hbm [shape: f32[2,8,32], index: 1, kind: input, shape index: {}]
  %s2 = inlined_call_operand.hbm [shape: f32[4,8,8], index: 2, kind: input, shape index: {}]
  %s3 = inlined_call_operand.hbm [shape: f32[32,32], index: 3, kind: input, shape index: {}]
  %s4 = inlined_call_operand.hbm [shape: f32[32,32], index: 4, kind: input, shape index: {}]
  %s5 = inlined_call_operand.hbm [shape: f32[32,32], index: 5, kind: input, shape index: {}]
  %s6 = inlined_call_operand.hbm [shape: f32[32,32], index: 6, kind: input, shape index: {}]
  %s7 = inlined_call_operand.hbm [shape: f32[32,32], index: 7, kind: input, shape index: {}]
  %s8 = inlined_call_operand.hbm [shape: f32[2,8,32], index: 8, kind: output, shape index: {}]
  %s9 = sld [smem:[#allocation0]]
  $region97: #{tpu_custom_call.1} parent=0
    _
  %s11 = ssub.s32 1, %s9
  %s12 = scalar_select 0, %s11, %s9
  $region1: #{tpu_custom_call.1} parent=0
    #allocation2 [shape = 'u8[8192]{0}', space=vmem, size = 0x2000, scoped, tag = 'input window, operand 0']
    #allocation3 [shape = 's32[2]{0}', space=sflag, size = 0x8, scoped, tag = 'scoped memory for tpu_custom_call.1']
    #allocation4 [shape = 's32[2]{0}', space=sflag, size = 0x8, scoped, tag = 'scoped memory for tpu_custom_call.1']
    #allocation5 [shape = 'u8[8192]{0}', space=vmem, size = 0x2000, scoped, tag = 'input window, operand 1']
    #allocation6 [shape = 's32[2]{0}', space=sflag, size = 0x8, scoped, tag = 'scoped memory for tpu_custom_call.1']
    #allocation7 [shape = 'u8[16384]{0}', space=vmem, size = 0x4000, scoped, tag = 'input window, operand 2, single buffered']
    #allocation8 [shape = 'u8[16384]{0}', space=vmem, size = 0x4000, scoped, tag = 'input window, operand 3, single buffered']
    #allocation9 [shape = 's32[1]{0}', space=sflag, size = 0x4, scoped, tag = 'scoped memory for tpu_custom_call.1']
    #allocation10 [shape = 'u8[16384]{0}', space=vmem, size = 0x4000, scoped, tag = 'input window, operand 4, single buffered']
    #allocation11 [shape = 'u8[16384]{0}', space=vmem, size = 0x4000, scoped, tag = 'input window, operand 5, single buffered']
    #allocation12 [shape = 's32[1]{0}', space=sflag, size = 0x4, scoped, tag = 'scoped memory for tpu_custom_call.1']
    #allocation13 [shape = 'u8[16384]{0}', space=vmem, size = 0x4000, scoped, tag = 'input window, operand 6, single buffered']
    #allocation14 [shape = 'u8[16384]{0}', space=vmem, size = 0x4000, scoped, tag = 'input window, operand 7, single buffered']
    #allocation15 [shape = 's32[1]{0}', space=sflag, size = 0x4, scoped, tag = 'scoped memory for tpu_custom_call.1']
    #allocation16 [shape = 'u8[8192]{0}', space=vmem, size = 0x2000, scoped, tag = 'output window, operand 0']
    %13 = vsyncpa [#allocation3], 0
    %s14 = scalar_lea.sflag [#allocation3], 1
    %15 = vsyncpa %s14, 0
    %16 = vsyncpa [#allocation6], 0
    %s17 = scalar_lea.sflag [#allocation6], 1
    %18 = vsyncpa %s17, 0
    %19 = vsyncpa [#allocation9], 0
    %20 = vsyncpa [#allocation12], 0
    %21 = vsyncpa [#allocation15], 0
    %22 = vsyncpa [#allocation4], 0
    %s23 = scalar_lea.sflag [#allocation4], 1
    %24 = vsyncpa %s23, 0
    loop: start=0, step=1, limit=4
    $region2: #{tpu_custom_call.1} parent=1 // loop_pre_header
      _
    $region3: #{tpu_custom_call.1} parent=1 // loop_header
      %s26 = sphi 0, %s30
      %p27 = scmp.ge.s32.totalorder %s26, 4
      %s36 = sphi 0, %s38
      %s39 = sphi 0, %s36
      %s40 = sphi 0, %s39
      %s56 = sphi 0, %s40
      %s62 = sphi 0, %s64
      %s65 = sphi 0, %s62
      %s66 = sphi 0, %s65
      %s82 = sphi 0, %s66
      %s86 = sphi 0, %s86
      %s88 = sphi 0, %s86
      %s89 = sphi 0, %s88
      %s103 = sphi 0, %s89
      %s107 = sphi 0, %s107
      %s109 = sphi 0, %s107
      %s110 = sphi 0, %s109
      %s124 = sphi 0, %s110
      %s128 = sphi 0, %s128
      %s130 = sphi 0, %s128
      %s131 = sphi 0, %s130
      %s145 = sphi 0, %s131
      %s149 = sphi 0, %s149
      %s151 = sphi 0, %s149
      %s152 = sphi 0, %s151
      %s166 = sphi 0, %s152
      %s170 = sphi 0, %s170
      %s172 = sphi 0, %s170
      %s173 = sphi 0, %s172
      %s187 = sphi 0, %s173
      %s191 = sphi 0, %s191
      %s193 = sphi 0, %s191
      %s194 = sphi 0, %s193
      %s208 = sphi 0, %s194
      %s214 = sphi 0, %s216
      %s217 = sphi 0, %s214
      %s218 = sphi 0, %s217
      %s234 = sphi 0, %s218
    $region4: #{tpu_custom_call.1} parent=1 // loop_header_branch
      %29 = sbr.rel (%p27) target = $region8
    $region5: #{tpu_custom_call.1} parent=1 // loop_body
      %s31 = ssub.s32 %s26, 1
      %s32 = ssub.s32 %s26, 2
      %s33 = sadd.s32 %s26, 1
      %s34 = ssub.s32 %s26, %s33
      %p35 = scmp.eq.s32.totalorder %s34, 0
      %s37 = sadd.s32 %s36, 1
      %s38 = scalar_select %p35, %s36, %s37
      %p41 = pneg %p35
      %p42 = scmp.eq.s32.totalorder %s26, 1
      %p43 = por %p41, %p42
      %p44 = scmp.ne.s32.totalorder %s36, %s39
      %p45 = scmp.eq.s32.totalorder %s26, 0
      %p46 = por %p44, %p45
      %p47 = scmp.ne.s32.totalorder %s36, %s39
      %p48 = scmp.eq.s32.totalorder %s31, 1
      %p49 = por %p47, %p48
      %p50 = scmp.ne.s32.totalorder %s39, %s40
      %p51 = scmp.eq.s32.totalorder %s31, 0
      %p52 = por %p50, %p51
      %p53 = scmp.ne.s32.totalorder %s39, %s40
      %p54 = scmp.eq.s32.totalorder %s32, 1
      %p55 = por %p53, %p54
      %p57 = scmp.ne.s32.totalorder %s40, %s56
      %p58 = scmp.eq.s32.totalorder %s32, 0
      %p59 = por %p57, %p58
      %s60 = ssub.s32 %s26, %s33
      %p61 = scmp.eq.s32.totalorder %s60, 0
      %s63 = sadd.s32 %s62, 1
      %s64 = scalar_select %p61, %s62, %s63
      %p67 = pneg %p61
      %p68 = scmp.eq.s32.totalorder %s26, 1
      %p69 = por %p67, %p68
      %p70 = scmp.ne.s32.totalorder %s62, %s65
      %p71 = scmp.eq.s32.totalorder %s26, 0
      %p72 = por %p70, %p71
      %p73 = scmp.ne.s32.totalorder %s62, %s65
      %p74 = scmp.eq.s32.totalorder %s31, 1
      %p75 = por %p73, %p74
      %p76 = scmp.ne.s32.totalorder %s65, %s66
      %p77 = scmp.eq.s32.totalorder %s31, 0
      %p78 = por %p76, %p77
      %p79 = scmp.ne.s32.totalorder %s65, %s66
      %p80 = scmp.eq.s32.totalorder %s32, 1
      %p81 = por %p79, %p80
      %p83 = scmp.ne.s32.totalorder %s66, %s82
      %p84 = scmp.eq.s32.totalorder %s32, 0
      %p85 = por %p83, %p84
      %s87 = sadd.s32 %s86, 1
      %p90 = scmp.eq.s32.totalorder %s26, 1
      %p91 = scmp.ne.s32.totalorder %s86, %s88
      %p92 = scmp.eq.s32.totalorder %s26, 0
      %p93 = por %p91, %p92
      %p94 = scmp.ne.s32.totalorder %s86, %s88
      %p95 = scmp.eq.s32.totalorder %s31, 1
      %p96 = por %p94, %p95
      %p97 = scmp.ne.s32.totalorder %s88, %s89
      %p98 = scmp.eq.s32.totalorder %s31, 0
      %p99 = por %p97, %p98
      %p100 = scmp.ne.s32.totalorder %s88, %s89
      %p101 = scmp.eq.s32.totalorder %s32, 1
      %p102 = por %p100, %p101
      %p104 = scmp.ne.s32.totalorder %s89, %s103
      %p105 = scmp.eq.s32.totalorder %s32, 0
      %p106 = por %p104, %p105
      %s108 = sadd.s32 %s107, 1
      %p111 = scmp.eq.s32.totalorder %s26, 1
      %p112 = scmp.ne.s32.totalorder %s107, %s109
      %p113 = scmp.eq.s32.totalorder %s26, 0
      %p114 = por %p112, %p113
      %p115 = scmp.ne.s32.totalorder %s107, %s109
      %p116 = scmp.eq.s32.totalorder %s31, 1
      %p117 = por %p115, %p116
      %p118 = scmp.ne.s32.totalorder %s109, %s110
      %p119 = scmp.eq.s32.totalorder %s31, 0
      %p120 = por %p118, %p119
      %p121 = scmp.ne.s32.totalorder %s109, %s110
      %p122 = scmp.eq.s32.totalorder %s32, 1
      %p123 = por %p121, %p122
      %p125 = scmp.ne.s32.totalorder %s110, %s124
      %p126 = scmp.eq.s32.totalorder %s32, 0
      %p127 = por %p125, %p126
      %s129 = sadd.s32 %s128, 1
      %p132 = scmp.eq.s32.totalorder %s26, 1
      %p133 = scmp.ne.s32.totalorder %s128, %s130
      %p134 = scmp.eq.s32.totalorder %s26, 0
      %p135 = por %p133, %p134
      %p136 = scmp.ne.s32.totalorder %s128, %s130
      %p137 = scmp.eq.s32.totalorder %s31, 1
      %p138 = por %p136, %p137
      %p139 = scmp.ne.s32.totalorder %s130, %s131
      %p140 = scmp.eq.s32.totalorder %s31, 0
      %p141 = por %p139, %p140
      %p142 = scmp.ne.s32.totalorder %s130, %s131
      %p143 = scmp.eq.s32.totalorder %s32, 1
      %p144 = por %p142, %p143
      %p146 = scmp.ne.s32.totalorder %s131, %s145
      %p147 = scmp.eq.s32.totalorder %s32, 0
      %p148 = por %p146, %p147
      %s150 = sadd.s32 %s149, 1
      %p153 = scmp.eq.s32.totalorder %s26, 1
      %p154 = scmp.ne.s32.totalorder %s149, %s151
      %p155 = scmp.eq.s32.totalorder %s26, 0
      %p156 = por %p154, %p155
      %p157 = scmp.ne.s32.totalorder %s149, %s151
      %p158 = scmp.eq.s32.totalorder %s31, 1
      %p159 = por %p157, %p158
      %p160 = scmp.ne.s32.totalorder %s151, %s152
      %p161 = scmp.eq.s32.totalorder %s31, 0
      %p162 = por %p160, %p161
      %p163 = scmp.ne.s32.totalorder %s151, %s152
      %p164 = scmp.eq.s32.totalorder %s32, 1
      %p165 = por %p163, %p164
      %p167 = scmp.ne.s32.totalorder %s152, %s166
      %p168 = scmp.eq.s32.totalorder %s32, 0
      %p169 = por %p167, %p168
      %s171 = sadd.s32 %s170, 1
      %p174 = scmp.eq.s32.totalorder %s26, 1
      %p175 = scmp.ne.s32.totalorder %s170, %s172
      %p176 = scmp.eq.s32.totalorder %s26, 0
      %p177 = por %p175, %p176
      %p178 = scmp.ne.s32.totalorder %s170, %s172
      %p179 = scmp.eq.s32.totalorder %s31, 1
      %p180 = por %p178, %p179
      %p181 = scmp.ne.s32.totalorder %s172, %s173
      %p182 = scmp.eq.s32.totalorder %s31, 0
      %p183 = por %p181, %p182
      %p184 = scmp.ne.s32.totalorder %s172, %s173
      %p185 = scmp.eq.s32.totalorder %s32, 1
      %p186 = por %p184, %p185
      %p188 = scmp.ne.s32.totalorder %s173, %s187
      %p189 = scmp.eq.s32.totalorder %s32, 0
      %p190 = por %p188, %p189
      %s192 = sadd.s32 %s191, 1
      %p195 = scmp.eq.s32.totalorder %s26, 1
      %p196 = scmp.ne.s32.totalorder %s191, %s193
      %p197 = scmp.eq.s32.totalorder %s26, 0
      %p198 = por %p196, %p197
      %p199 = scmp.ne.s32.totalorder %s191, %s193
      %p200 = scmp.eq.s32.totalorder %s31, 1
      %p201 = por %p199, %p200
      %p202 = scmp.ne.s32.totalorder %s193, %s194
      %p203 = scmp.eq.s32.totalorder %s31, 0
      %p204 = por %p202, %p203
      %p205 = scmp.ne.s32.totalorder %s193, %s194
      %p206 = scmp.eq.s32.totalorder %s32, 1
      %p207 = por %p205, %p206
      %p209 = scmp.ne.s32.totalorder %s194, %s208
      %p210 = scmp.eq.s32.totalorder %s32, 0
      %p211 = por %p209, %p210
      %s212 = ssub.s32 %s26, %s33
      %p213 = scmp.eq.s32.totalorder %s212, 0
      %s215 = sadd.s32 %s214, 1
      %s216 = scalar_select %p213, %s214, %s215
      %p219 = pneg %p213
      %p220 = scmp.eq.s32.totalorder %s26, 1
      %p221 = por %p219, %p220
      %p222 = scmp.ne.s32.totalorder %s214, %s217
      %p223 = scmp.eq.s32.totalorder %s26, 0
      %p224 = por %p222, %p223
      %p225 = scmp.ne.s32.totalorder %s214, %s217
      %p226 = scmp.eq.s32.totalorder %s31, 1
      %p227 = por %p225, %p226
      %p228 = scmp.ne.s32.totalorder %s217, %s218
      %p229 = scmp.eq.s32.totalorder %s31, 0
      %p230 = por %p228, %p229
      %p231 = scmp.ne.s32.totalorder %s217, %s218
      %p232 = scmp.eq.s32.totalorder %s32, 1
      %p233 = por %p231, %p232
      %p235 = scmp.ne.s32.totalorder %s218, %s234
      %p236 = scmp.eq.s32.totalorder %s32, 0
      %p237 = por %p235, %p236
      %p238 = scmp.le.s32.totalorder 1, %s26
      %p239 = scmp.lt.s32.totalorder %s26, 3
      %p240 = pnand %p238, %p239
      %p241 = pneg %p240
      // Predicated region
      $region9: #{tpu_custom_call.1} parent=5 // pred_check
        _
      $region10: #{tpu_custom_call.1} parent=5 // pred_check_branch
        %243 = sbr.rel (%p240) target = $region12
      $region11: #{tpu_custom_call.1} parent=5 // pred_region
        %s244 = ssub.s32 %s26, 1
        // Predicated region
        $region13: #{tpu_custom_call.1} parent=11 // pred_check
          %p245 = pneg %p99
        $region14: #{tpu_custom_call.1} parent=11 // pred_check_branch
          %247 = sbr.rel (%p245) target = $region16
        $region15: #{tpu_custom_call.1} parent=11 // pred_region
          %s249 = ssub.s32 512, 512
          %250 = vsyncadd [#allocation6], %s249
          %s251 = sshll.u32 [#allocation7], 4
          %s252 = int_to_ptr.vmem [resolvable:$true] %s251
          %257 = dma.hbm_to_vmem [thread:$0]  %s2, 512, %s252, [#allocation6], 128, 128, 8
        $region16: #{tpu_custom_call.1} parent=11 // pred_fallthru
          _
        // Predicated region
        $region17: #{tpu_custom_call.1} parent=11 // pred_check
          %p258 = pneg %p120
        $region18: #{tpu_custom_call.1} parent=11 // pred_check_branch
          %260 = sbr.rel (%p258) target = $region20
        $region19: #{tpu_custom_call.1} parent=11 // pred_region
          %s262 = ssub.s32 512, 512
          %263 = vsyncadd [#allocation9], %s262
          %s264 = sshll.u32 [#allocation8], 4
          %s265 = int_to_ptr.vmem [resolvable:$true] %s264
          %270 = dma.hbm_to_vmem [thread:$0]  %s3, 512, %s265, [#allocation9], 128, 128, 8
        $region20: #{tpu_custom_call.1} parent=11 // pred_fallthru
          _
        // Predicated region
        $region21: #{tpu_custom_call.1} parent=11 // pred_check
          %p271 = pneg %p141
        $region22: #{tpu_custom_call.1} parent=11 // pred_check_branch
          %273 = sbr.rel (%p271) target = $region24
        $region23: #{tpu_custom_call.1} parent=11 // pred_region
          %s275 = ssub.s32 512, 512
          %276 = vsyncadd [#allocation9], %s275
          %s277 = sshll.u32 [#allocation10], 4
          %s278 = int_to_ptr.vmem [resolvable:$true] %s277
          %283 = dma.hbm_to_vmem [thread:$0]  %s4, 512, %s278, [#allocation9], 128, 128, 8
        $region24: #{tpu_custom_call.1} parent=11 // pred_fallthru
          _
        // Predicated region
        $region25: #{tpu_custom_call.1} parent=11 // pred_check
          %p284 = pneg %p162
        $region26: #{tpu_custom_call.1} parent=11 // pred_check_branch
          %286 = sbr.rel (%p284) target = $region28
        $region27: #{tpu_custom_call.1} parent=11 // pred_region
          %s288 = ssub.s32 512, 512
          %289 = vsyncadd [#allocation12], %s288
          %s290 = sshll.u32 [#allocation11], 4
          %s291 = int_to_ptr.vmem [resolvable:$true] %s290
          %296 = dma.hbm_to_vmem [thread:$0]  %s5, 512, %s291, [#allocation12], 128, 128, 8
        $region28: #{tpu_custom_call.1} parent=11 // pred_fallthru
          _
        // Predicated region
        $region29: #{tpu_custom_call.1} parent=11 // pred_check
          %p297 = pneg %p183
        $region30: #{tpu_custom_call.1} parent=11 // pred_check_branch
          %299 = sbr.rel (%p297) target = $region32
        $region31: #{tpu_custom_call.1} parent=11 // pred_region
          %s301 = ssub.s32 512, 512
          %302 = vsyncadd [#allocation12], %s301
          %s303 = sshll.u32 [#allocation13], 4
          %s304 = int_to_ptr.vmem [resolvable:$true] %s303
          %309 = dma.hbm_to_vmem [thread:$0]  %s6, 512, %s304, [#allocation12], 128, 128, 8
        $region32: #{tpu_custom_call.1} parent=11 // pred_fallthru
          _
        // Predicated region
        $region33: #{tpu_custom_call.1} parent=11 // pred_check
          %p310 = pneg %p204
        $region34: #{tpu_custom_call.1} parent=11 // pred_check_branch
          %312 = sbr.rel (%p310) target = $region36
        $region35: #{tpu_custom_call.1} parent=11 // pred_region
          %s314 = ssub.s32 512, 512
          %315 = vsyncadd [#allocation15], %s314
          %s316 = sshll.u32 [#allocation14], 4
          %s317 = int_to_ptr.vmem [resolvable:$true] %s316
          %322 = dma.hbm_to_vmem [thread:$0]  %s7, 512, %s317, [#allocation15], 128, 128, 8
        $region36: #{tpu_custom_call.1} parent=11 // pred_fallthru
          _
      $region12: #{tpu_custom_call.1} parent=5 // pred_fallthru
        _
      %p323 = scmp.lt.s32.totalorder %s26, 2
      // Predicated region
      $region37: #{tpu_custom_call.1} parent=5 // pred_check
        %p324 = pneg %p323
      $region38: #{tpu_custom_call.1} parent=5 // pred_check_branch
        %326 = sbr.rel (%p324) target = $region40
      $region39: #{tpu_custom_call.1} parent=5 // pred_region
        // Predicated region
        $region41: #{tpu_custom_call.1} parent=39 // pred_check
          %p327 = pneg %p46
        $region42: #{tpu_custom_call.1} parent=39 // pred_check_branch
          %329 = sbr.rel (%p327) target = $region44
        $region43: #{tpu_custom_call.1} parent=39 // pred_region
          %s330 = sand.u32 %s36, 1
          %s331 = scalar_lea.sflag [#allocation3], %s330
          %s332 = sand.u32 %s36, 1
          %s333 = smul.addr %s332, 8
          %s334 = scalar_lea.vmem [#allocation2], %s333
          %s336 = ssub.s32 128, 128
          %337 = vsyncadd %s331, %s336
          %s338 = smul.addr %s26, 128
          %s339 = scalar_lea.hbm %s0, %s338
          %s341 = sshll.u32 %s334, 4
          %s342 = int_to_ptr.vmem [resolvable:$true] %s341
          %344 = dma.hbm_to_vmem [thread:$0]  %s339, 128, %s342, %s331
        $region44: #{tpu_custom_call.1} parent=39 // pred_fallthru
          _
        // Predicated region
        $region45: #{tpu_custom_call.1} parent=39 // pred_check
          %p345 = pneg %p72
        $region46: #{tpu_custom_call.1} parent=39 // pred_check_branch
          %347 = sbr.rel (%p345) target = $region48
        $region47: #{tpu_custom_call.1} parent=39 // pred_region
          %s348 = sand.u32 %s26, 1
          %s349 = scalar_lea.sflag [#allocation6], %s348
          %s350 = sand.u32 %s62, 1
          %s351 = smul.addr %s350, 8
          %s352 = scalar_lea.vmem [#allocation5], %s351
          %s354 = ssub.s32 128, 128
          %355 = vsyncadd %s349, %s354
          %s356 = smul.addr %s26, 128
          %s357 = scalar_lea.hbm %s1, %s356
          %s359 = sshll.u32 %s352, 4
          %s360 = int_to_ptr.vmem [resolvable:$true] %s359
          %362 = dma.hbm_to_vmem [thread:$0]  %s357, 128, %s360, %s349
        $region48: #{tpu_custom_call.1} parent=39 // pred_fallthru
          _
      $region40: #{tpu_custom_call.1} parent=5 // pred_fallthru
        _
      %p363 = scmp.le.s32.totalorder 1, %s26
      %p364 = scmp.lt.s32.totalorder %s26, 3
      %p365 = pnand %p363, %p364
      %p366 = pneg %p365
      // Predicated region
      $region49: #{tpu_custom_call.1} parent=5 // pred_check
        _
      $region50: #{tpu_custom_call.1} parent=5 // pred_check_branch
        %368 = sbr.rel (%p365) target = $region52
      $region51: #{tpu_custom_call.1} parent=5 // pred_region
        %s369 = ssub.s32 %s26, 1
        %s370 = sand.u32 %s39, 1
        %s371 = scalar_lea.sflag [#allocation3], %s370
        %s372 = sand.u32 %s39, 1
        %s373 = smul.addr %s372, 8
        %s374 = scalar_lea.vmem [#allocation2], %s373
        // Predicated region
        $region53: #{tpu_custom_call.1} parent=51 // pred_check
          %p375 = pneg %p52
        $region54: #{tpu_custom_call.1} parent=51 // pred_check_branch
          %377 = sbr.rel (%p375) target = $region56
        $region55: #{tpu_custom_call.1} parent=51 // pred_region
          %378 = dma.done %s371, 128
        $region56: #{tpu_custom_call.1} parent=51 // pred_fallthru
          _
        %s379 = sand.u32 %s31, 1
        %s380 = scalar_lea.sflag [#allocation6], %s379
        %s381 = sand.u32 %s65, 1
        %s382 = smul.addr %s381, 8
        %s383 = scalar_lea.vmem [#allocation5], %s382
        // Predicated region
        $region57: #{tpu_custom_call.1} parent=51 // pred_check
          %p384 = pneg %p78
        $region58: #{tpu_custom_call.1} parent=51 // pred_check_branch
          %386 = sbr.rel (%p384) target = $region60
        $region59: #{tpu_custom_call.1} parent=51 // pred_region
          %387 = dma.done %s380, 128
        $region60: #{tpu_custom_call.1} parent=51 // pred_fallthru
          _
        // Predicated region
        $region61: #{tpu_custom_call.1} parent=51 // pred_check
          %p388 = pneg %p99
        $region62: #{tpu_custom_call.1} parent=51 // pred_check_branch
          %390 = sbr.rel (%p388) target = $region64
        $region63: #{tpu_custom_call.1} parent=51 // pred_region
          %391 = dma.done [#allocation6], 512
        $region64: #{tpu_custom_call.1} parent=51 // pred_fallthru
          _
        // Predicated region
        $region65: #{tpu_custom_call.1} parent=51 // pred_check
          %p392 = pneg %p120
        $region66: #{tpu_custom_call.1} parent=51 // pred_check_branch
          %394 = sbr.rel (%p392) target = $region68
        $region67: #{tpu_custom_call.1} parent=51 // pred_region
          %395 = dma.done [#allocation9], 512
        $region68: #{tpu_custom_call.1} parent=51 // pred_fallthru
          _
        // Predicated region
        $region69: #{tpu_custom_call.1} parent=51 // pred_check
          %p396 = pneg %p141
        $region70: #{tpu_custom_call.1} parent=51 // pred_check_branch
          %398 = sbr.rel (%p396) target = $region72
        $region71: #{tpu_custom_call.1} parent=51 // pred_region
          %399 = dma.done [#allocation9], 512
        $region72: #{tpu_custom_call.1} parent=51 // pred_fallthru
          _
        // Predicated region
        $region73: #{tpu_custom_call.1} parent=51 // pred_check
          %p400 = pneg %p162
        $region74: #{tpu_custom_call.1} parent=51 // pred_check_branch
          %402 = sbr.rel (%p400) target = $region76
        $region75: #{tpu_custom_call.1} parent=51 // pred_region
          %403 = dma.done [#allocation12], 512
        $region76: #{tpu_custom_call.1} parent=51 // pred_fallthru
          _
        // Predicated region
        $region77: #{tpu_custom_call.1} parent=51 // pred_check
          %p404 = pneg %p183
        $region78: #{tpu_custom_call.1} parent=51 // pred_check_branch
          %406 = sbr.rel (%p404) target = $region80
        $region79: #{tpu_custom_call.1} parent=51 // pred_region
          %407 = dma.done [#allocation12], 512
        $region80: #{tpu_custom_call.1} parent=51 // pred_fallthru
          _
        // Predicated region
        $region81: #{tpu_custom_call.1} parent=51 // pred_check
          %p408 = pneg %p204
        $region82: #{tpu_custom_call.1} parent=51 // pred_check_branch
          %410 = sbr.rel (%p408) target = $region84
        $region83: #{tpu_custom_call.1} parent=51 // pred_region
          %411 = dma.done [#allocation15], 512
        $region84: #{tpu_custom_call.1} parent=51 // pred_fallthru
          _
        %s412 = sand.u32 %s39, 1
        %s413 = scalar_lea.sflag [#allocation3], %s412
        %s414 = sand.u32 %s39, 1
        %s415 = smul.addr %s414, 8
        %s416 = scalar_lea.vmem [#allocation2], %s415
        %p417 = pneg %p52
        %p418 = pneg %p49
        %s419 = sand.u32 %s31, 1
        %s420 = scalar_lea.sflag [#allocation6], %s419
        %s421 = sand.u32 %s65, 1
        %s422 = smul.addr %s421, 8
        %s423 = scalar_lea.vmem [#allocation5], %s422
        %p424 = pneg %p78
        %p425 = pneg %p75
        %p426 = pneg %p99
        %p427 = pneg %p96
        %p428 = pneg %p120
        %p429 = pneg %p117
        %p430 = pneg %p141
        %p431 = pneg %p138
        %p432 = pneg %p162
        %p433 = pneg %p159
        %p434 = pneg %p183
        %p435 = pneg %p180
        %p436 = pneg %p204
        %p437 = pneg %p201
        %p438 = pneg %p230
        %p439 = pneg %p227
        %s440 = sand.u32 %s217, 1
        %s441 = scalar_lea.sflag [#allocation4], %s440
        %s442 = sand.u32 %s217, 1
        %s443 = smul.addr %s442, 8
        %s444 = scalar_lea.vmem [#allocation16], %s443
        %v445 = vld [vmem:[%s374] sm:$0xff]
        %v446 = vld [vmem:[%s383] sm:$0xff]
        %v447 = vadd.f32 %v445, %v446
        %v448 = vld [vmem:[#allocation8] sm:$0xff]
        %v449 = vld [vmem:[#allocation8 + $0x8] sm:$0xff]
        %v450 = vld [vmem:[#allocation8 + $0x10] sm:$0xff]
        %v451 = vld [vmem:[#allocation8 + $0x18] sm:$0xff]
        %vm452 = vcmask 261120
        %v454 = vsel %vm452, %v447, 0
        %456 = vmatprep.subr.mxu0 0.0
        %457 = vmatpush1.msra.mxu0 0.0
        %458 = vmatprep.subr.mxu0 0.0
        %459 = vmatpush1.msra.mxu0 0.0
        %460 = vmatprep.subr.mxu0 0.0
        %461 = vmatpush1.msra.mxu0 0.0
        %462 = vmatprep.subr.mxu0 0.0
        %463 = vmatpush1.msra.mxu0 0.0
        %464 = vmatprep.subr.mxu0 0.0
        %465 = vmatpush1.msra.mxu0 0.0
        %466 = vmatprep.subr.mxu0 0.0
        %467 = vmatpush1.msra.mxu0 0.0
        %468 = vmatprep.subr.mxu0 0.0
        %469 = vmatpush1.msra.mxu0 0.0
        %470 = vmatprep.subr.mxu0 0.0
        %471 = vmatpush1.msra.mxu0 0.0
        %472 = vmatprep.subr.mxu0 0.0
        %473 = vmatpush1.msra.mxu0 0.0
        %474 = vmatprep.subr.mxu0 0.0
        %475 = vmatpush1.msra.mxu0 0.0
        %476 = vmatprep.subr.mxu0 0.0
        %477 = vmatpush1.msra.mxu0 0.0
        %478 = vmatprep.subr.mxu0 0.0
        %479 = vmatpush1.msra.mxu0 0.0
        %480 = vmatprep.subr.mxu0 0.0
        %481 = vmatpush1.msra.mxu0 %v451
        %482 = vmatprep.subr.mxu0 0.0
        %483 = vmatpush1.msra.mxu0 %v450
        %484 = vmatprep.subr.mxu0 0.0
        %485 = vmatpush1.msra.mxu0 %v449
        %486 = vmatprep.subr.mxu0 0.0
        %487 = vmatpush1.msra.mxu0 %v448
        %488 = vmatprep.subr.mxu0 0.0
        %489 = vmatpush2.msra.mxu0 0.0
        %490 = vmatprep.subr.mxu0 0.0
        %491 = vmatpush2.msra.mxu0 0.0
        %492 = vmatprep.subr.mxu0 0.0
        %493 = vmatpush2.msra.mxu0 0.0
        %494 = vmatprep.subr.mxu0 0.0
        %495 = vmatpush2.msra.mxu0 0.0
        %496 = vmatprep.subr.mxu0 0.0
        %497 = vmatpush2.msra.mxu0 0.0
        %498 = vmatprep.subr.mxu0 0.0
        %499 = vmatpush2.msra.mxu0 0.0
        %500 = vmatprep.subr.mxu0 0.0
        %501 = vmatpush2.msra.mxu0 0.0
        %502 = vmatprep.subr.mxu0 0.0
        %503 = vmatpush2.msra.mxu0 0.0
        %504 = vmatprep.subr.mxu0 0.0
        %505 = vmatpush2.msra.mxu0 0.0
        %506 = vmatprep.subr.mxu0 0.0
        %507 = vmatpush2.msra.mxu0 0.0
        %508 = vmatprep.subr.mxu0 0.0
        %509 = vmatpush2.msra.mxu0 0.0
        %510 = vmatprep.subr.mxu0 0.0
        %511 = vmatpush2.msra.mxu0 0.0
        %512 = vmatprep.subr.mxu0 0.0
        %513 = vmatpush2.msra.mxu0 0.0
        %514 = vmatprep.subr.mxu0 0.0
        %515 = vmatpush2.msra.mxu0 0.0
        %516 = vmatprep.subr.mxu0 0.0
        %517 = vmatpush2.msra.mxu0 0.0
        %518 = vmatprep.subr.mxu0 0.0
        %519 = vmatpush2.msra.mxu0 0.0
        %520 = vmatprep.mubr.f32.mxu0 0.0
        %521 = vmatmul.mubr.f32.gmra.mxu0 %v454
        %v522 = vpop.f32.mrf.mxu0
        %v523 = vadd.f32 0.0, %v522
        %v524 = vpop.f32.mrf.mxu0
        %525 = vdwg.mxu0
        %v526 = vld [vmem:[#allocation10] sm:$0xff]
        %v527 = vld [vmem:[#allocation10 + $0x8] sm:$0xff]
        %v528 = vld [vmem:[#allocation10 + $0x10] sm:$0xff]
        %v529 = vld [vmem:[#allocation10 + $0x18] sm:$0xff]
        %530 = vmatprep.subr.mxu0 0.0
        %531 = vmatpush1.msra.mxu0 0.0
        %532 = vmatprep.subr.mxu0 0.0
        %533 = vmatpush1.msra.mxu0 0.0
        %534 = vmatprep.subr.mxu0 0.0
        %535 = vmatpush1.msra.mxu0 0.0
        %536 = vmatprep.subr.mxu0 0.0
        %537 = vmatpush1.msra.mxu0 0.0
        %538 = vmatprep.subr.mxu0 0.0
        %539 = vmatpush1.msra.mxu0 0.0
        %540 = vmatprep.subr.mxu0 0.0
        %541 = vmatpush1.msra.mxu0 0.0
        %542 = vmatprep.subr.mxu0 0.0
        %543 = vmatpush1.msra.mxu0 0.0
        %544 = vmatprep.subr.mxu0 0.0
        %545 = vmatpush1.msra.mxu0 0.0
        %546 = vmatprep.subr.mxu0 0.0
        %547 = vmatpush1.msra.mxu0 0.0
        %548 = vmatprep.subr.mxu0 0.0
        %549 = vmatpush1.msra.mxu0 0.0
        %550 = vmatprep.subr.mxu0 0.0
        %551 = vmatpush1.msra.mxu0 0.0
        %552 = vmatprep.subr.mxu0 0.0
        %553 = vmatpush1.msra.mxu0 0.0
        %554 = vmatprep.subr.mxu0 0.0
        %555 = vmatpush1.msra.mxu0 %v529
        %556 = vmatprep.subr.mxu0 0.0
        %557 = vmatpush1.msra.mxu0 %v528
        %558 = vmatprep.subr.mxu0 0.0
        %559 = vmatpush1.msra.mxu0 %v527
        %560 = vmatprep.subr.mxu0 0.0
        %561 = vmatpush1.msra.mxu0 %v526
        %562 = vmatprep.subr.mxu0 0.0
        %563 = vmatpush2.msra.mxu0 0.0
        %564 = vmatprep.subr.mxu0 0.0
        %565 = vmatpush2.msra.mxu0 0.0
        %566 = vmatprep.subr.mxu0 0.0
        %567 = vmatpush2.msra.mxu0 0.0
        %568 = vmatprep.subr.mxu0 0.0
        %569 = vmatpush2.msra.mxu0 0.0
        %570 = vmatprep.subr.mxu0 0.0
        %571 = vmatpush2.msra.mxu0 0.0
        %572 = vmatprep.subr.mxu0 0.0
        %573 = vmatpush2.msra.mxu0 0.0
        %574 = vmatprep.subr.mxu0 0.0
        %575 = vmatpush2.msra.mxu0 0.0
        %576 = vmatprep.subr.mxu0 0.0
        %577 = vmatpush2.msra.mxu0 0.0
        %578 = vmatprep.subr.mxu0 0.0
        %579 = vmatpush2.msra.mxu0 0.0
        %580 = vmatprep.subr.mxu0 0.0
        %581 = vmatpush2.msra.mxu0 0.0
        %582 = vmatprep.subr.mxu0 0.0
        %583 = vmatpush2.msra.mxu0 0.0
        %584 = vmatprep.subr.mxu0 0.0
        %585 = vmatpush2.msra.mxu0 0.0
        %586 = vmatprep.subr.mxu0 0.0
        %587 = vmatpush2.msra.mxu0 0.0
        %588 = vmatprep.subr.mxu0 0.0
        %589 = vmatpush2.msra.mxu0 0.0
        %590 = vmatprep.subr.mxu0 0.0
        %591 = vmatpush2.msra.mxu0 0.0
        %592 = vmatprep.subr.mxu0 0.0
        %593 = vmatpush2.msra.mxu0 0.0
        %594 = vmatprep.mubr.f32.mxu0 0.0
        %595 = vmatmul.mubr.f32.gmra.mxu0 %v454
        %v596 = vpop.f32.mrf.mxu0
        %v597 = vadd.f32 0.0, %v596
        %v598 = vpop.f32.mrf.mxu0
        %599 = vdwg.mxu0
        %v600 = vld [vmem:[#allocation11] sm:$0xff]
        %v601 = vld [vmem:[#allocation11 + $0x8] sm:$0xff]
        %v602 = vld [vmem:[#allocation11 + $0x10] sm:$0xff]
        %v603 = vld [vmem:[#allocation11 + $0x18] sm:$0xff]
        %v605 = vsel %vm452, %v445, 0
        %607 = vmatprep.subr.mxu0 0.0
        %608 = vmatpush1.msra.mxu0 0.0
        %609 = vmatprep.subr.mxu0 0.0
        %610 = vmatpush1.msra.mxu0 0.0
        %611 = vmatprep.subr.mxu0 0.0
        %612 = vmatpush1.msra.mxu0 0.0
        %613 = vmatprep.subr.mxu0 0.0
        %614 = vmatpush1.msra.mxu0 0.0
        %615 = vmatprep.subr.mxu0 0.0
        %616 = vmatpush1.msra.mxu0 0.0
        %617 = vmatprep.subr.mxu0 0.0
        %618 = vmatpush1.msra.mxu0 0.0
        %619 = vmatprep.subr.mxu0 0.0
        %620 = vmatpush1.msra.mxu0 0.0
        %621 = vmatprep.subr.mxu0 0.0
        %622 = vmatpush1.msra.mxu0 0.0
        %623 = vmatprep.subr.mxu0 0.0
        %624 = vmatpush1.msra.mxu0 0.0
        %625 = vmatprep.subr.mxu0 0.0
        %626 = vmatpush1.msra.mxu0 0.0
        %627 = vmatprep.subr.mxu0 0.0
        %628 = vmatpush1.msra.mxu0 0.0
        %629 = vmatprep.subr.mxu0 0.0
        %630 = vmatpush1.msra.mxu0 0.0
        %631 = vmatprep.subr.mxu0 0.0
        %632 = vmatpush1.msra.mxu0 %v603
        %633 = vmatprep.subr.mxu0 0.0
        %634 = vmatpush1.msra.mxu0 %v602
        %635 = vmatprep.subr.mxu0 0.0
        %636 = vmatpush1.msra.mxu0 %v601
        %637 = vmatprep.subr.mxu0 0.0
        %638 = vmatpush1.msra.mxu0 %v600
        %639 = vmatprep.subr.mxu0 0.0
        %640 = vmatpush2.msra.mxu0 0.0
        %641 = vmatprep.subr.mxu0 0.0
        %642 = vmatpush2.msra.mxu0 0.0
        %643 = vmatprep.subr.mxu0 0.0
        %644 = vmatpush2.msra.mxu0 0.0
        %645 = vmatprep.subr.mxu0 0.0
        %646 = vmatpush2.msra.mxu0 0.0
        %647 = vmatprep.subr.mxu0 0.0
        %648 = vmatpush2.msra.mxu0 0.0
        %649 = vmatprep.subr.mxu0 0.0
        %650 = vmatpush2.msra.mxu0 0.0
        %651 = vmatprep.subr.mxu0 0.0
        %652 = vmatpush2.msra.mxu0 0.0
        %653 = vmatprep.subr.mxu0 0.0
        %654 = vmatpush2.msra.mxu0 0.0
        %655 = vmatprep.subr.mxu0 0.0
        %656 = vmatpush2.msra.mxu0 0.0
        %657 = vmatprep.subr.mxu0 0.0
        %658 = vmatpush2.msra.mxu0 0.0
        %659 = vmatprep.subr.mxu0 0.0
        %660 = vmatpush2.msra.mxu0 0.0
        %661 = vmatprep.subr.mxu0 0.0
        %662 = vmatpush2.msra.mxu0 0.0
        %663 = vmatprep.subr.mxu0 0.0
        %664 = vmatpush2.msra.mxu0 0.0
        %665 = vmatprep.subr.mxu0 0.0
        %666 = vmatpush2.msra.mxu0 0.0
        %667 = vmatprep.subr.mxu0 0.0
        %668 = vmatpush2.msra.mxu0 0.0
        %669 = vmatprep.subr.mxu0 0.0
        %670 = vmatpush2.msra.mxu0 0.0
        %671 = vmatprep.mubr.f32.mxu0 0.0
        %672 = vmatmul.mubr.f32.gmra.mxu0 %v605
        %v673 = vpop.f32.mrf.mxu0
        %v674 = vadd.f32 0.0, %v673
        %v675 = vpop.f32.mrf.mxu0
        %676 = vdwg.mxu0
        %v677 = vld [vmem:[#allocation13] sm:$0xff]
        %v678 = vld [vmem:[#allocation13 + $0x8] sm:$0xff]
        %v679 = vld [vmem:[#allocation13 + $0x10] sm:$0xff]
        %v680 = vld [vmem:[#allocation13 + $0x18] sm:$0xff]
        %681 = vmatprep.subr.mxu0 0.0
        %682 = vmatpush1.msra.mxu0 0.0
        %683 = vmatprep.subr.mxu0 0.0
        %684 = vmatpush1.msra.mxu0 0.0
        %685 = vmatprep.subr.mxu0 0.0
        %686 = vmatpush1.msra.mxu0 0.0
        %687 = vmatprep.subr.mxu0 0.0
        %688 = vmatpush1.msra.mxu0 0.0
        %689 = vmatprep.subr.mxu0 0.0
        %690 = vmatpush1.msra.mxu0 0.0
        %691 = vmatprep.subr.mxu0 0.0
        %692 = vmatpush1.msra.mxu0 0.0
        %693 = vmatprep.subr.mxu0 0.0
        %694 = vmatpush1.msra.mxu0 0.0
        %695 = vmatprep.subr.mxu0 0.0
        %696 = vmatpush1.msra.mxu0 0.0
        %697 = vmatprep.subr.mxu0 0.0
        %698 = vmatpush1.msra.mxu0 0.0
        %699 = vmatprep.subr.mxu0 0.0
        %700 = vmatpush1.msra.mxu0 0.0
        %701 = vmatprep.subr.mxu0 0.0
        %702 = vmatpush1.msra.mxu0 0.0
        %703 = vmatprep.subr.mxu0 0.0
        %704 = vmatpush1.msra.mxu0 0.0
        %705 = vmatprep.subr.mxu0 0.0
        %706 = vmatpush1.msra.mxu0 %v680
        %707 = vmatprep.subr.mxu0 0.0
        %708 = vmatpush1.msra.mxu0 %v679
        %709 = vmatprep.subr.mxu0 0.0
        %710 = vmatpush1.msra.mxu0 %v678
        %711 = vmatprep.subr.mxu0 0.0
        %712 = vmatpush1.msra.mxu0 %v677
        %713 = vmatprep.subr.mxu0 0.0
        %714 = vmatpush2.msra.mxu0 0.0
        %715 = vmatprep.subr.mxu0 0.0
        %716 = vmatpush2.msra.mxu0 0.0
        %717 = vmatprep.subr.mxu0 0.0
        %718 = vmatpush2.msra.mxu0 0.0
        %719 = vmatprep.subr.mxu0 0.0
        %720 = vmatpush2.msra.mxu0 0.0
        %721 = vmatprep.subr.mxu0 0.0
        %722 = vmatpush2.msra.mxu0 0.0
        %723 = vmatprep.subr.mxu0 0.0
        %724 = vmatpush2.msra.mxu0 0.0
        %725 = vmatprep.subr.mxu0 0.0
        %726 = vmatpush2.msra.mxu0 0.0
        %727 = vmatprep.subr.mxu0 0.0
        %728 = vmatpush2.msra.mxu0 0.0
        %729 = vmatprep.subr.mxu0 0.0
        %730 = vmatpush2.msra.mxu0 0.0
        %731 = vmatprep.subr.mxu0 0.0
        %732 = vmatpush2.msra.mxu0 0.0
        %733 = vmatprep.subr.mxu0 0.0
        %734 = vmatpush2.msra.mxu0 0.0
        %735 = vmatprep.subr.mxu0 0.0
        %736 = vmatpush2.msra.mxu0 0.0
        %737 = vmatprep.subr.mxu0 0.0
        %738 = vmatpush2.msra.mxu0 0.0
        %739 = vmatprep.subr.mxu0 0.0
        %740 = vmatpush2.msra.mxu0 0.0
        %741 = vmatprep.subr.mxu0 0.0
        %742 = vmatpush2.msra.mxu0 0.0
        %743 = vmatprep.subr.mxu0 0.0
        %744 = vmatpush2.msra.mxu0 0.0
        %745 = vmatprep.mubr.f32.mxu0 0.0
        %746 = vmatmul.mubr.f32.gmra.mxu0 %v605
        %v747 = vpop.f32.mrf.mxu0
        %v748 = vadd.f32 0.0, %v747
        %v749 = vpop.f32.mrf.mxu0
        %750 = vdwg.mxu0
        %v751 = vld [vmem:[#allocation7] sm:$0xff]
        %vm752 = vcmask 64512
        %v754 = vsel %vm752, %v523, 0
        %v757 = vsel %vm752, %v597, 0
        %759 = vmatprep.subr.mxu0 0.0
        %760 = vmatpush1.xpose.msra.mxu0 0.0
        %761 = vmatprep.subr.mxu0 0.0
        %762 = vmatpush1.xpose.msra.mxu0 0.0
        %763 = vmatprep.subr.mxu0 0.0
        %764 = vmatpush1.xpose.msra.mxu0 0.0
        %765 = vmatprep.subr.mxu0 0.0
        %766 = vmatpush1.xpose.msra.mxu0 0.0
        %767 = vmatprep.subr.mxu0 0.0
        %768 = vmatpush1.xpose.msra.mxu0 0.0
        %769 = vmatprep.subr.mxu0 0.0
        %770 = vmatpush1.xpose.msra.mxu0 0.0
        %771 = vmatprep.subr.mxu0 0.0
        %772 = vmatpush1.xpose.msra.mxu0 0.0
        %773 = vmatprep.subr.mxu0 0.0
        %774 = vmatpush1.xpose.msra.mxu0 0.0
        %775 = vmatprep.subr.mxu0 0.0
        %776 = vmatpush1.xpose.msra.mxu0 0.0
        %777 = vmatprep.subr.mxu0 0.0
        %778 = vmatpush1.xpose.msra.mxu0 0.0
        %779 = vmatprep.subr.mxu0 0.0
        %780 = vmatpush1.xpose.msra.mxu0 0.0
        %781 = vmatprep.subr.mxu0 0.0
        %782 = vmatpush1.xpose.msra.mxu0 0.0
        %783 = vmatprep.subr.mxu0 0.0
        %784 = vmatpush1.xpose.msra.mxu0 0.0
        %785 = vmatprep.subr.mxu0 0.0
        %786 = vmatpush1.xpose.msra.mxu0 0.0
        %787 = vmatprep.subr.mxu0 0.0
        %788 = vmatpush1.xpose.msra.mxu0 0.0
        %789 = vmatprep.subr.mxu0 0.0
        %790 = vmatpush1.xpose.msra.mxu0 %v757
        %791 = vmatprep.subr.mxu0 0.0
        %792 = vmatpush2.xpose.msra.mxu0 0.0
        %793 = vmatprep.subr.mxu0 0.0
        %794 = vmatpush2.xpose.msra.mxu0 0.0
        %795 = vmatprep.subr.mxu0 0.0
        %796 = vmatpush2.xpose.msra.mxu0 0.0
        %797 = vmatprep.subr.mxu0 0.0
        %798 = vmatpush2.xpose.msra.mxu0 0.0
        %799 = vmatprep.subr.mxu0 0.0
        %800 = vmatpush2.xpose.msra.mxu0 0.0
        %801 = vmatprep.subr.mxu0 0.0
        %802 = vmatpush2.xpose.msra.mxu0 0.0
        %803 = vmatprep.subr.mxu0 0.0
        %804 = vmatpush2.xpose.msra.mxu0 0.0
        %805 = vmatprep.subr.mxu0 0.0
        %806 = vmatpush2.xpose.msra.mxu0 0.0
        %807 = vmatprep.subr.mxu0 0.0
        %808 = vmatpush2.xpose.msra.mxu0 0.0
        %809 = vmatprep.subr.mxu0 0.0
        %810 = vmatpush2.xpose.msra.mxu0 0.0
        %811 = vmatprep.subr.mxu0 0.0
        %812 = vmatpush2.xpose.msra.mxu0 0.0
        %813 = vmatprep.subr.mxu0 0.0
        %814 = vmatpush2.xpose.msra.mxu0 0.0
        %815 = vmatprep.subr.mxu0 0.0
        %816 = vmatpush2.xpose.msra.mxu0 0.0
        %817 = vmatprep.subr.mxu0 0.0
        %818 = vmatpush2.xpose.msra.mxu0 0.0
        %819 = vmatprep.subr.mxu0 0.0
        %820 = vmatpush2.xpose.msra.mxu0 0.0
        %821 = vmatprep.subr.mxu0 0.0
        %822 = vmatpush2.xpose.msra.mxu0 0.0
        %823 = vmatprep.mubr.f32.mxu0 0.0
        %824 = vmatmul.mubr.f32.gmra.mxu0 %v754
        %v825 = vpop.f32.mrf.mxu0
        %v826 = vadd.f32 0.0, %v825
        %v827 = vpop.f32.mrf.mxu0
        %828 = vdwg.mxu0
        %v829 = vmul.f32 %v826, %v751
        %v830 = vsel %vm752, %v829, 0.0
        %831 = vadd.xlane.f32.xlu0 %v830
        %v832 = vpop.xlane.xlu0 %831
        %v833 = vand.u32 2147483647, %v832
        %v834 = vmax.f32 %v833, 1.0
        %v835 = vrcp.pop %v834
        %v836 = vmul.f32 %v829, %v835
        %v838 = vsel %vm752, %v836, 0
        %840 = vmatprep.subr.mxu0 0.0
        %841 = vmatpush1.msra.mxu0 0.0
        %842 = vmatprep.subr.mxu0 0.0
        %843 = vmatpush1.msra.mxu0 0.0
        %844 = vmatprep.subr.mxu0 0.0
        %845 = vmatpush1.msra.mxu0 0.0
        %846 = vmatprep.subr.mxu0 0.0
        %847 = vmatpush1.msra.mxu0 0.0
        %848 = vmatprep.subr.mxu0 0.0
        %849 = vmatpush1.msra.mxu0 0.0
        %850 = vmatprep.subr.mxu0 0.0
        %851 = vmatpush1.msra.mxu0 0.0
        %852 = vmatprep.subr.mxu0 0.0
        %853 = vmatpush1.msra.mxu0 0.0
        %854 = vmatprep.subr.mxu0 0.0
        %855 = vmatpush1.msra.mxu0 0.0
        %856 = vmatprep.subr.mxu0 0.0
        %857 = vmatpush1.msra.mxu0 0.0
        %858 = vmatprep.subr.mxu0 0.0
        %859 = vmatpush1.msra.mxu0 0.0
        %860 = vmatprep.subr.mxu0 0.0
        %861 = vmatpush1.msra.mxu0 0.0
        %862 = vmatprep.subr.mxu0 0.0
        %863 = vmatpush1.msra.mxu0 0.0
        %864 = vmatprep.subr.mxu0 0.0
        %865 = vmatpush1.msra.mxu0 0.0
        %866 = vmatprep.subr.mxu0 0.0
        %867 = vmatpush1.msra.mxu0 0.0
        %868 = vmatprep.subr.mxu0 0.0
        %869 = vmatpush1.msra.mxu0 0.0
        %870 = vmatprep.subr.mxu0 0.0
        %871 = vmatpush1.msra.mxu0 %v674
        %872 = vmatprep.subr.mxu0 0.0
        %873 = vmatpush2.msra.mxu0 0.0
        %874 = vmatprep.subr.mxu0 0.0
        %875 = vmatpush2.msra.mxu0 0.0
        %876 = vmatprep.subr.mxu0 0.0
        %877 = vmatpush2.msra.mxu0 0.0
        %878 = vmatprep.subr.mxu0 0.0
        %879 = vmatpush2.msra.mxu0 0.0
        %880 = vmatprep.subr.mxu0 0.0
        %881 = vmatpush2.msra.mxu0 0.0
        %882 = vmatprep.subr.mxu0 0.0
        %883 = vmatpush2.msra.mxu0 0.0
        %884 = vmatprep.subr.mxu0 0.0
        %885 = vmatpush2.msra.mxu0 0.0
        %886 = vmatprep.subr.mxu0 0.0
        %887 = vmatpush2.msra.mxu0 0.0
        %888 = vmatprep.subr.mxu0 0.0
        %889 = vmatpush2.msra.mxu0 0.0
        %890 = vmatprep.subr.mxu0 0.0
        %891 = vmatpush2.msra.mxu0 0.0
        %892 = vmatprep.subr.mxu0 0.0
        %893 = vmatpush2.msra.mxu0 0.0
        %894 = vmatprep.subr.mxu0 0.0
        %895 = vmatpush2.msra.mxu0 0.0
        %896 = vmatprep.subr.mxu0 0.0
        %897 = vmatpush2.msra.mxu0 0.0
        %898 = vmatprep.subr.mxu0 0.0
        %899 = vmatpush2.msra.mxu0 0.0
        %900 = vmatprep.subr.mxu0 0.0
        %901 = vmatpush2.msra.mxu0 0.0
        %902 = vmatprep.subr.mxu0 0.0
        %903 = vmatpush2.msra.mxu0 0.0
        %904 = vmatprep.mubr.f32.mxu0 0.0
        %905 = vmatmul.mubr.f32.gmra.mxu0 %v838
        %v906 = vpop.f32.mrf.mxu0
        %v907 = vadd.f32 0.0, %v906
        %v908 = vpop.f32.mrf.mxu0
        %909 = vdwg.mxu0
        %v910 = vmul.f32 %v907, %v907
        %v911 = vsel %vm752, %v910, 0.0
        %912 = vadd.xlane.f32.xlu0 %v911
        %v913 = vpop.xlane.xlu0 %912
        %v914 = vrcp.pop 8.0
        %v915 = vmul.f32 %v913, %v914
        %v916 = vadd.f32 %v915, 1e-06
        %v917 = vrsqrt.pop %v916
        %v918 = vmul.f32 %v907, %v917
        %v919 = vxor.u32 %v748, 2147483648
        %v920 = vmul.f32 %v919, 1.442695
        %v921 = vpow.pop %v920
        %v922 = vadd.f32 %v921, 1.0
        %v923 = vrcp.pop %v922
        %v924 = vmul.f32 1.0, %v923
        %v925 = vmul.f32 %v748, %v924
        %v926 = vmul.f32 %v925, %v918
        %s927 = scalar_lea.vmem [#allocation7], 8
        %v928 = vld [vmem:[%s927] sm:$0xff]
        %929 = vrot.lane.b32.xlu0 %v523, 120
        %v930 = vpop.permute.xlu0 %929
        %931 = vrot.lane.b32.xlu0 %v597, 120
        %v932 = vpop.permute.xlu0 %931
        %v933 = vsel %vm752, %v930, 0
        %v935 = vsel %vm752, %v932, 0
        %937 = vmatprep.subr.mxu0 0.0
        %938 = vmatpush1.xpose.msra.mxu0 0.0
        %939 = vmatprep.subr.mxu0 0.0
        %940 = vmatpush1.xpose.msra.mxu0 0.0
        %941 = vmatprep.subr.mxu0 0.0
        %942 = vmatpush1.xpose.msra.mxu0 0.0
        %943 = vmatprep.subr.mxu0 0.0
        %944 = vmatpush1.xpose.msra.mxu0 0.0
        %945 = vmatprep.subr.mxu0 0.0
        %946 = vmatpush1.xpose.msra.mxu0 0.0
        %947 = vmatprep.subr.mxu0 0.0
        %948 = vmatpush1.xpose.msra.mxu0 0.0
        %949 = vmatprep.subr.mxu0 0.0
        %950 = vmatpush1.xpose.msra.mxu0 0.0
        %951 = vmatprep.subr.mxu0 0.0
        %952 = vmatpush1.xpose.msra.mxu0 0.0
        %953 = vmatprep.subr.mxu0 0.0
        %954 = vmatpush1.xpose.msra.mxu0 0.0
        %955 = vmatprep.subr.mxu0 0.0
        %956 = vmatpush1.xpose.msra.mxu0 0.0
        %957 = vmatprep.subr.mxu0 0.0
        %958 = vmatpush1.xpose.msra.mxu0 0.0
        %959 = vmatprep.subr.mxu0 0.0
        %960 = vmatpush1.xpose.msra.mxu0 0.0
        %961 = vmatprep.subr.mxu0 0.0
        %962 = vmatpush1.xpose.msra.mxu0 0.0
        %963 = vmatprep.subr.mxu0 0.0
        %964 = vmatpush1.xpose.msra.mxu0 0.0
        %965 = vmatprep.subr.mxu0 0.0
        %966 = vmatpush1.xpose.msra.mxu0 0.0
        %967 = vmatprep.subr.mxu0 0.0
        %968 = vmatpush1.xpose.msra.mxu0 %v935
        %969 = vmatprep.subr.mxu0 0.0
        %970 = vmatpush2.xpose.msra.mxu0 0.0
        %971 = vmatprep.subr.mxu0 0.0
        %972 = vmatpush2.xpose.msra.mxu0 0.0
        %973 = vmatprep.subr.mxu0 0.0
        %974 = vmatpush2.xpose.msra.mxu0 0.0
        %975 = vmatprep.subr.mxu0 0.0
        %976 = vmatpush2.xpose.msra.mxu0 0.0
        %977 = vmatprep.subr.mxu0 0.0
        %978 = vmatpush2.xpose.msra.mxu0 0.0
        %979 = vmatprep.subr.mxu0 0.0
        %980 = vmatpush2.xpose.msra.mxu0 0.0
        %981 = vmatprep.subr.mxu0 0.0
        %982 = vmatpush2.xpose.msra.mxu0 0.0
        %983 = vmatprep.subr.mxu0 0.0
        %984 = vmatpush2.xpose.msra.mxu0 0.0
        %985 = vmatprep.subr.mxu0 0.0
        %986 = vmatpush2.xpose.msra.mxu0 0.0
        %987 = vmatprep.subr.mxu0 0.0
        %988 = vmatpush2.xpose.msra.mxu0 0.0
        %989 = vmatprep.subr.mxu0 0.0
        %990 = vmatpush2.xpose.msra.mxu0 0.0
        %991 = vmatprep.subr.mxu0 0.0
        %992 = vmatpush2.xpose.msra.mxu0 0.0
        %993 = vmatprep.subr.mxu0 0.0
        %994 = vmatpush2.xpose.msra.mxu0 0.0
        %995 = vmatprep.subr.mxu0 0.0
        %996 = vmatpush2.xpose.msra.mxu0 0.0
        %997 = vmatprep.subr.mxu0 0.0
        %998 = vmatpush2.xpose.msra.mxu0 0.0
        %999 = vmatprep.subr.mxu0 0.0
        %1000 = vmatpush2.xpose.msra.mxu0 0.0
        %1001 = vmatprep.mubr.f32.mxu0 0.0
        %1002 = vmatmul.mubr.f32.gmra.mxu0 %v933
        %v1003 = vpop.f32.mrf.mxu0
        %v1004 = vadd.f32 0.0, %v1003
        %v1005 = vpop.f32.mrf.mxu0
        %1006 = vdwg.mxu0
        %v1007 = vmul.f32 %v1004, %v928
        %v1008 = vsel %vm752, %v1007, 0.0
        %1009 = vadd.xlane.f32.xlu0 %v1008
        %v1010 = vpop.xlane.xlu0 %1009
        %v1011 = vand.u32 2147483647, %v1010
        %v1012 = vmax.f32 %v1011, 1.0
        %v1013 = vrcp.pop %v1012
        %v1014 = vmul.f32 %v1007, %v1013
        %1016 = vrot.lane.b32.xlu0 %v674, 120
        %v1017 = vpop.permute.xlu0 %1016
        %v1020 = vsel %vm752, %v1014, 0
        %1022 = vmatprep.subr.mxu0 0.0
        %1023 = vmatpush1.msra.mxu0 0.0
        %1024 = vmatprep.subr.mxu0 0.0
        %1025 = vmatpush1.msra.mxu0 0.0
        %1026 = vmatprep.subr.mxu0 0.0
        %1027 = vmatpush1.msra.mxu0 0.0
        %1028 = vmatprep.subr.mxu0 0.0
        %1029 = vmatpush1.msra.mxu0 0.0
        %1030 = vmatprep.subr.mxu0 0.0
        %1031 = vmatpush1.msra.mxu0 0.0
        %1032 = vmatprep.subr.mxu0 0.0
        %1033 = vmatpush1.msra.mxu0 0.0
        %1034 = vmatprep.subr.mxu0 0.0
        %1035 = vmatpush1.msra.mxu0 0.0
        %1036 = vmatprep.subr.mxu0 0.0
        %1037 = vmatpush1.msra.mxu0 0.0
        %1038 = vmatprep.subr.mxu0 0.0
        %1039 = vmatpush1.msra.mxu0 0.0
        %1040 = vmatprep.subr.mxu0 0.0
        %1041 = vmatpush1.msra.mxu0 0.0
        %1042 = vmatprep.subr.mxu0 0.0
        %1043 = vmatpush1.msra.mxu0 0.0
        %1044 = vmatprep.subr.mxu0 0.0
        %1045 = vmatpush1.msra.mxu0 0.0
        %1046 = vmatprep.subr.mxu0 0.0
        %1047 = vmatpush1.msra.mxu0 0.0
        %1048 = vmatprep.subr.mxu0 0.0
        %1049 = vmatpush1.msra.mxu0 0.0
        %1050 = vmatprep.subr.mxu0 0.0
        %1051 = vmatpush1.msra.mxu0 0.0
        %1052 = vmatprep.subr.mxu0 0.0
        %1053 = vmatpush1.msra.mxu0 %v1017
        %1054 = vmatprep.subr.mxu0 0.0
        %1055 = vmatpush2.msra.mxu0 0.0
        %1056 = vmatprep.subr.mxu0 0.0
        %1057 = vmatpush2.msra.mxu0 0.0
        %1058 = vmatprep.subr.mxu0 0.0
        %1059 = vmatpush2.msra.mxu0 0.0
        %1060 = vmatprep.subr.mxu0 0.0
        %1061 = vmatpush2.msra.mxu0 0.0
        %1062 = vmatprep.subr.mxu0 0.0
        %1063 = vmatpush2.msra.mxu0 0.0
        %1064 = vmatprep.subr.mxu0 0.0
        %1065 = vmatpush2.msra.mxu0 0.0
        %1066 = vmatprep.subr.mxu0 0.0
        %1067 = vmatpush2.msra.mxu0 0.0
        %1068 = vmatprep.subr.mxu0 0.0
        %1069 = vmatpush2.msra.mxu0 0.0
        %1070 = vmatprep.subr.mxu0 0.0
        %1071 = vmatpush2.msra.mxu0 0.0
        %1072 = vmatprep.subr.mxu0 0.0
        %1073 = vmatpush2.msra.mxu0 0.0
        %1074 = vmatprep.subr.mxu0 0.0
        %1075 = vmatpush2.msra.mxu0 0.0
        %1076 = vmatprep.subr.mxu0 0.0
        %1077 = vmatpush2.msra.mxu0 0.0
        %1078 = vmatprep.subr.mxu0 0.0
        %1079 = vmatpush2.msra.mxu0 0.0
        %1080 = vmatprep.subr.mxu0 0.0
        %1081 = vmatpush2.msra.mxu0 0.0
        %1082 = vmatprep.subr.mxu0 0.0
        %1083 = vmatpush2.msra.mxu0 0.0
        %1084 = vmatprep.subr.mxu0 0.0
        %1085 = vmatpush2.msra.mxu0 0.0
        %1086 = vmatprep.mubr.f32.mxu0 0.0
        %1087 = vmatmul.mubr.f32.gmra.mxu0 %v1020
        %v1088 = vpop.f32.mrf.mxu0
        %v1089 = vadd.f32 0.0, %v1088
        %v1090 = vpop.f32.mrf.mxu0
        %1091 = vdwg.mxu0
        %v1092 = vmul.f32 %v1089, %v1089
        %v1093 = vsel %vm752, %v1092, 0.0
        %1094 = vadd.xlane.f32.xlu0 %v1093
        %v1095 = vpop.xlane.xlu0 %1094
        %v1096 = vmul.f32 %v1095, %v914
        %v1097 = vadd.f32 %v1096, 1e-06
        %v1098 = vrsqrt.pop %v1097
        %v1099 = vmul.f32 %v1089, %v1098
        %1101 = vrot.lane.b32.xlu0 %v1099, 8
        %v1102 = vpop.permute.xlu0 %1101
        %v1104 = vmul.f32 %v925, %v1102
        %s1105 = scalar_lea.vmem [#allocation7], 16
        %v1106 = vld [vmem:[%s1105] sm:$0xff]
        %1107 = vrot.lane.b32.xlu0 %v523, 112
        %v1108 = vpop.permute.xlu0 %1107
        %1109 = vrot.lane.b32.xlu0 %v597, 112
        %v1110 = vpop.permute.xlu0 %1109
        %v1111 = vsel %vm752, %v1108, 0
        %v1113 = vsel %vm752, %v1110, 0
        %1115 = vmatprep.subr.mxu0 0.0
        %1116 = vmatpush1.xpose.msra.mxu0 0.0
        %1117 = vmatprep.subr.mxu0 0.0
        %1118 = vmatpush1.xpose.msra.mxu0 0.0
        %1119 = vmatprep.subr.mxu0 0.0
        %1120 = vmatpush1.xpose.msra.mxu0 0.0
        %1121 = vmatprep.subr.mxu0 0.0
        %1122 = vmatpush1.xpose.msra.mxu0 0.0
        %1123 = vmatprep.subr.mxu0 0.0
        %1124 = vmatpush1.xpose.msra.mxu0 0.0
        %1125 = vmatprep.subr.mxu0 0.0
        %1126 = vmatpush1.xpose.msra.mxu0 0.0
        %1127 = vmatprep.subr.mxu0 0.0
        %1128 = vmatpush1.xpose.msra.mxu0 0.0
        %1129 = vmatprep.subr.mxu0 0.0
        %1130 = vmatpush1.xpose.msra.mxu0 0.0
        %1131 = vmatprep.subr.mxu0 0.0
        %1132 = vmatpush1.xpose.msra.mxu0 0.0
        %1133 = vmatprep.subr.mxu0 0.0
        %1134 = vmatpush1.xpose.msra.mxu0 0.0
        %1135 = vmatprep.subr.mxu0 0.0
        %1136 = vmatpush1.xpose.msra.mxu0 0.0
        %1137 = vmatprep.subr.mxu0 0.0
        %1138 = vmatpush1.xpose.msra.mxu0 0.0
        %1139 = vmatprep.subr.mxu0 0.0
        %1140 = vmatpush1.xpose.msra.mxu0 0.0
        %1141 = vmatprep.subr.mxu0 0.0
        %1142 = vmatpush1.xpose.msra.mxu0 0.0
        %1143 = vmatprep.subr.mxu0 0.0
        %1144 = vmatpush1.xpose.msra.mxu0 0.0
        %1145 = vmatprep.subr.mxu0 0.0
        %1146 = vmatpush1.xpose.msra.mxu0 %v1113
        %1147 = vmatprep.subr.mxu0 0.0
        %1148 = vmatpush2.xpose.msra.mxu0 0.0
        %1149 = vmatprep.subr.mxu0 0.0
        %1150 = vmatpush2.xpose.msra.mxu0 0.0
        %1151 = vmatprep.subr.mxu0 0.0
        %1152 = vmatpush2.xpose.msra.mxu0 0.0
        %1153 = vmatprep.subr.mxu0 0.0
        %1154 = vmatpush2.xpose.msra.mxu0 0.0
        %1155 = vmatprep.subr.mxu0 0.0
        %1156 = vmatpush2.xpose.msra.mxu0 0.0
        %1157 = vmatprep.subr.mxu0 0.0
        %1158 = vmatpush2.xpose.msra.mxu0 0.0
        %1159 = vmatprep.subr.mxu0 0.0
        %1160 = vmatpush2.xpose.msra.mxu0 0.0
        %1161 = vmatprep.subr.mxu0 0.0
        %1162 = vmatpush2.xpose.msra.mxu0 0.0
        %1163 = vmatprep.subr.mxu0 0.0
        %1164 = vmatpush2.xpose.msra.mxu0 0.0
        %1165 = vmatprep.subr.mxu0 0.0
        %1166 = vmatpush2.xpose.msra.mxu0 0.0
        %1167 = vmatprep.subr.mxu0 0.0
        %1168 = vmatpush2.xpose.msra.mxu0 0.0
        %1169 = vmatprep.subr.mxu0 0.0
        %1170 = vmatpush2.xpose.msra.mxu0 0.0
        %1171 = vmatprep.subr.mxu0 0.0
        %1172 = vmatpush2.xpose.msra.mxu0 0.0
        %1173 = vmatprep.subr.mxu0 0.0
        %1174 = vmatpush2.xpose.msra.mxu0 0.0
        %1175 = vmatprep.subr.mxu0 0.0
        %1176 = vmatpush2.xpose.msra.mxu0 0.0
        %1177 = vmatprep.subr.mxu0 0.0
        %1178 = vmatpush2.xpose.msra.mxu0 0.0
        %1179 = vmatprep.mubr.f32.mxu0 0.0
        %1180 = vmatmul.mubr.f32.gmra.mxu0 %v1111
        %v1181 = vpop.f32.mrf.mxu0
        %v1182 = vadd.f32 0.0, %v1181
        %v1183 = vpop.f32.mrf.mxu0
        %1184 = vdwg.mxu0
        %v1185 = vmul.f32 %v1182, %v1106
        %v1186 = vsel %vm752, %v1185, 0.0
        %1187 = vadd.xlane.f32.xlu0 %v1186
        %v1188 = vpop.xlane.xlu0 %1187
        %v1189 = vand.u32 2147483647, %v1188
        %v1190 = vmax.f32 %v1189, 1.0
        %v1191 = vrcp.pop %v1190
        %v1192 = vmul.f32 %v1185, %v1191
        %1193 = vrot.lane.b32.xlu0 %v674, 112
        %v1194 = vpop.permute.xlu0 %1193
        %v1197 = vsel %vm752, %v1192, 0
        %1199 = vmatprep.subr.mxu0 0.0
        %1200 = vmatpush1.msra.mxu0 0.0
        %1201 = vmatprep.subr.mxu0 0.0
        %1202 = vmatpush1.msra.mxu0 0.0
        %1203 = vmatprep.subr.mxu0 0.0
        %1204 = vmatpush1.msra.mxu0 0.0
        %1205 = vmatprep.subr.mxu0 0.0
        %1206 = vmatpush1.msra.mxu0 0.0
        %1207 = vmatprep.subr.mxu0 0.0
        %1208 = vmatpush1.msra.mxu0 0.0
        %1209 = vmatprep.subr.mxu0 0.0
        %1210 = vmatpush1.msra.mxu0 0.0
        %1211 = vmatprep.subr.mxu0 0.0
        %1212 = vmatpush1.msra.mxu0 0.0
        %1213 = vmatprep.subr.mxu0 0.0
        %1214 = vmatpush1.msra.mxu0 0.0
        %1215 = vmatprep.subr.mxu0 0.0
        %1216 = vmatpush1.msra.mxu0 0.0
        %1217 = vmatprep.subr.mxu0 0.0
        %1218 = vmatpush1.msra.mxu0 0.0
        %1219 = vmatprep.subr.mxu0 0.0
        %1220 = vmatpush1.msra.mxu0 0.0
        %1221 = vmatprep.subr.mxu0 0.0
        %1222 = vmatpush1.msra.mxu0 0.0
        %1223 = vmatprep.subr.mxu0 0.0
        %1224 = vmatpush1.msra.mxu0 0.0
        %1225 = vmatprep.subr.mxu0 0.0
        %1226 = vmatpush1.msra.mxu0 0.0
        %1227 = vmatprep.subr.mxu0 0.0
        %1228 = vmatpush1.msra.mxu0 0.0
        %1229 = vmatprep.subr.mxu0 0.0
        %1230 = vmatpush1.msra.mxu0 %v1194
        %1231 = vmatprep.subr.mxu0 0.0
        %1232 = vmatpush2.msra.mxu0 0.0
        %1233 = vmatprep.subr.mxu0 0.0
        %1234 = vmatpush2.msra.mxu0 0.0
        %1235 = vmatprep.subr.mxu0 0.0
        %1236 = vmatpush2.msra.mxu0 0.0
        %1237 = vmatprep.subr.mxu0 0.0
        %1238 = vmatpush2.msra.mxu0 0.0
        %1239 = vmatprep.subr.mxu0 0.0
        %1240 = vmatpush2.msra.mxu0 0.0
        %1241 = vmatprep.subr.mxu0 0.0
        %1242 = vmatpush2.msra.mxu0 0.0
        %1243 = vmatprep.subr.mxu0 0.0
        %1244 = vmatpush2.msra.mxu0 0.0
        %1245 = vmatprep.subr.mxu0 0.0
        %1246 = vmatpush2.msra.mxu0 0.0
        %1247 = vmatprep.subr.mxu0 0.0
        %1248 = vmatpush2.msra.mxu0 0.0
        %1249 = vmatprep.subr.mxu0 0.0
        %1250 = vmatpush2.msra.mxu0 0.0
        %1251 = vmatprep.subr.mxu0 0.0
        %1252 = vmatpush2.msra.mxu0 0.0
        %1253 = vmatprep.subr.mxu0 0.0
        %1254 = vmatpush2.msra.mxu0 0.0
        %1255 = vmatprep.subr.mxu0 0.0
        %1256 = vmatpush2.msra.mxu0 0.0
        %1257 = vmatprep.subr.mxu0 0.0
        %1258 = vmatpush2.msra.mxu0 0.0
        %1259 = vmatprep.subr.mxu0 0.0
        %1260 = vmatpush2.msra.mxu0 0.0
        %1261 = vmatprep.subr.mxu0 0.0
        %1262 = vmatpush2.msra.mxu0 0.0
        %1263 = vmatprep.mubr.f32.mxu0 0.0
        %1264 = vmatmul.mubr.f32.gmra.mxu0 %v1197
        %v1265 = vpop.f32.mrf.mxu0
        %v1266 = vadd.f32 0.0, %v1265
        %v1267 = vpop.f32.mrf.mxu0
        %1268 = vdwg.mxu0
        %v1269 = vmul.f32 %v1266, %v1266
        %v1270 = vsel %vm752, %v1269, 0.0
        %1271 = vadd.xlane.f32.xlu0 %v1270
        %v1272 = vpop.xlane.xlu0 %1271
        %v1273 = vmul.f32 %v1272, %v914
        %v1274 = vadd.f32 %v1273, 1e-06
        %v1275 = vrsqrt.pop %v1274
        %v1276 = vmul.f32 %v1266, %v1275
        %1278 = vrot.lane.b32.xlu0 %v1276, 16
        %v1279 = vpop.permute.xlu0 %1278
        %v1281 = vmul.f32 %v925, %v1279
        %s1282 = scalar_lea.vmem [#allocation7], 24
        %v1283 = vld [vmem:[%s1282] sm:$0xff]
        %1284 = vrot.lane.b32.xlu0 %v523, 104
        %v1285 = vpop.permute.xlu0 %1284
        %1286 = vrot.lane.b32.xlu0 %v597, 104
        %v1287 = vpop.permute.xlu0 %1286
        %v1288 = vsel %vm752, %v1285, 0
        %v1290 = vsel %vm752, %v1287, 0
        %1292 = vmatprep.subr.mxu0 0.0
        %1293 = vmatpush1.xpose.msra.mxu0 0.0
        %1294 = vmatprep.subr.mxu0 0.0
        %1295 = vmatpush1.xpose.msra.mxu0 0.0
        %1296 = vmatprep.subr.mxu0 0.0
        %1297 = vmatpush1.xpose.msra.mxu0 0.0
        %1298 = vmatprep.subr.mxu0 0.0
        %1299 = vmatpush1.xpose.msra.mxu0 0.0
        %1300 = vmatprep.subr.mxu0 0.0
        %1301 = vmatpush1.xpose.msra.mxu0 0.0
        %1302 = vmatprep.subr.mxu0 0.0
        %1303 = vmatpush1.xpose.msra.mxu0 0.0
        %1304 = vmatprep.subr.mxu0 0.0
        %1305 = vmatpush1.xpose.msra.mxu0 0.0
        %1306 = vmatprep.subr.mxu0 0.0
        %1307 = vmatpush1.xpose.msra.mxu0 0.0
        %1308 = vmatprep.subr.mxu0 0.0
        %1309 = vmatpush1.xpose.msra.mxu0 0.0
        %1310 = vmatprep.subr.mxu0 0.0
        %1311 = vmatpush1.xpose.msra.mxu0 0.0
        %1312 = vmatprep.subr.mxu0 0.0
        %1313 = vmatpush1.xpose.msra.mxu0 0.0
        %1314 = vmatprep.subr.mxu0 0.0
        %1315 = vmatpush1.xpose.msra.mxu0 0.0
        %1316 = vmatprep.subr.mxu0 0.0
        %1317 = vmatpush1.xpose.msra.mxu0 0.0
        %1318 = vmatprep.subr.mxu0 0.0
        %1319 = vmatpush1.xpose.msra.mxu0 0.0
        %1320 = vmatprep.subr.mxu0 0.0
        %1321 = vmatpush1.xpose.msra.mxu0 0.0
        %1322 = vmatprep.subr.mxu0 0.0
        %1323 = vmatpush1.xpose.msra.mxu0 %v1290
        %1324 = vmatprep.subr.mxu0 0.0
        %1325 = vmatpush2.xpose.msra.mxu0 0.0
        %1326 = vmatprep.subr.mxu0 0.0
        %1327 = vmatpush2.xpose.msra.mxu0 0.0
        %1328 = vmatprep.subr.mxu0 0.0
        %1329 = vmatpush2.xpose.msra.mxu0 0.0
        %1330 = vmatprep.subr.mxu0 0.0
        %1331 = vmatpush2.xpose.msra.mxu0 0.0
        %1332 = vmatprep.subr.mxu0 0.0
        %1333 = vmatpush2.xpose.msra.mxu0 0.0
        %1334 = vmatprep.subr.mxu0 0.0
        %1335 = vmatpush2.xpose.msra.mxu0 0.0
        %1336 = vmatprep.subr.mxu0 0.0
        %1337 = vmatpush2.xpose.msra.mxu0 0.0
        %1338 = vmatprep.subr.mxu0 0.0
        %1339 = vmatpush2.xpose.msra.mxu0 0.0
        %1340 = vmatprep.subr.mxu0 0.0
        %1341 = vmatpush2.xpose.msra.mxu0 0.0
        %1342 = vmatprep.subr.mxu0 0.0
        %1343 = vmatpush2.xpose.msra.mxu0 0.0
        %1344 = vmatprep.subr.mxu0 0.0
        %1345 = vmatpush2.xpose.msra.mxu0 0.0
        %1346 = vmatprep.subr.mxu0 0.0
        %1347 = vmatpush2.xpose.msra.mxu0 0.0
        %1348 = vmatprep.subr.mxu0 0.0
        %1349 = vmatpush2.xpose.msra.mxu0 0.0
        %1350 = vmatprep.subr.mxu0 0.0
        %1351 = vmatpush2.xpose.msra.mxu0 0.0
        %1352 = vmatprep.subr.mxu0 0.0
        %1353 = vmatpush2.xpose.msra.mxu0 0.0
        %1354 = vmatprep.subr.mxu0 0.0
        %1355 = vmatpush2.xpose.msra.mxu0 0.0
        %1356 = vmatprep.mubr.f32.mxu0 0.0
        %1357 = vmatmul.mubr.f32.gmra.mxu0 %v1288
        %v1358 = vpop.f32.mrf.mxu0
        %v1359 = vadd.f32 0.0, %v1358
        %v1360 = vpop.f32.mrf.mxu0
        %1361 = vdwg.mxu0
        %v1362 = vmul.f32 %v1359, %v1283
        %v1363 = vsel %vm752, %v1362, 0.0
        %1364 = vadd.xlane.f32.xlu0 %v1363
        %v1365 = vpop.xlane.xlu0 %1364
        %v1366 = vand.u32 2147483647, %v1365
        %v1367 = vmax.f32 %v1366, 1.0
        %v1368 = vrcp.pop %v1367
        %v1369 = vmul.f32 %v1362, %v1368
        %1370 = vrot.lane.b32.xlu0 %v674, 104
        %v1371 = vpop.permute.xlu0 %1370
        %v1374 = vsel %vm752, %v1369, 0
        %1376 = vmatprep.subr.mxu0 0.0
        %1377 = vmatpush1.msra.mxu0 0.0
        %1378 = vmatprep.subr.mxu0 0.0
        %1379 = vmatpush1.msra.mxu0 0.0
        %1380 = vmatprep.subr.mxu0 0.0
        %1381 = vmatpush1.msra.mxu0 0.0
        %1382 = vmatprep.subr.mxu0 0.0
        %1383 = vmatpush1.msra.mxu0 0.0
        %1384 = vmatprep.subr.mxu0 0.0
        %1385 = vmatpush1.msra.mxu0 0.0
        %1386 = vmatprep.subr.mxu0 0.0
        %1387 = vmatpush1.msra.mxu0 0.0
        %1388 = vmatprep.subr.mxu0 0.0
        %1389 = vmatpush1.msra.mxu0 0.0
        %1390 = vmatprep.subr.mxu0 0.0
        %1391 = vmatpush1.msra.mxu0 0.0
        %1392 = vmatprep.subr.mxu0 0.0
        %1393 = vmatpush1.msra.mxu0 0.0
        %1394 = vmatprep.subr.mxu0 0.0
        %1395 = vmatpush1.msra.mxu0 0.0
        %1396 = vmatprep.subr.mxu0 0.0
        %1397 = vmatpush1.msra.mxu0 0.0
        %1398 = vmatprep.subr.mxu0 0.0
        %1399 = vmatpush1.msra.mxu0 0.0
        %1400 = vmatprep.subr.mxu0 0.0
        %1401 = vmatpush1.msra.mxu0 0.0
        %1402 = vmatprep.subr.mxu0 0.0
        %1403 = vmatpush1.msra.mxu0 0.0
        %1404 = vmatprep.subr.mxu0 0.0
        %1405 = vmatpush1.msra.mxu0 0.0
        %1406 = vmatprep.subr.mxu0 0.0
        %1407 = vmatpush1.msra.mxu0 %v1371
        %1408 = vmatprep.subr.mxu0 0.0
        %1409 = vmatpush2.msra.mxu0 0.0
        %1410 = vmatprep.subr.mxu0 0.0
        %1411 = vmatpush2.msra.mxu0 0.0
        %1412 = vmatprep.subr.mxu0 0.0
        %1413 = vmatpush2.msra.mxu0 0.0
        %1414 = vmatprep.subr.mxu0 0.0
        %1415 = vmatpush2.msra.mxu0 0.0
        %1416 = vmatprep.subr.mxu0 0.0
        %1417 = vmatpush2.msra.mxu0 0.0
        %1418 = vmatprep.subr.mxu0 0.0
        %1419 = vmatpush2.msra.mxu0 0.0
        %1420 = vmatprep.subr.mxu0 0.0
        %1421 = vmatpush2.msra.mxu0 0.0
        %1422 = vmatprep.subr.mxu0 0.0
        %1423 = vmatpush2.msra.mxu0 0.0
        %1424 = vmatprep.subr.mxu0 0.0
        %1425 = vmatpush2.msra.mxu0 0.0
        %1426 = vmatprep.subr.mxu0 0.0
        %1427 = vmatpush2.msra.mxu0 0.0
        %1428 = vmatprep.subr.mxu0 0.0
        %1429 = vmatpush2.msra.mxu0 0.0
        %1430 = vmatprep.subr.mxu0 0.0
        %1431 = vmatpush2.msra.mxu0 0.0
        %1432 = vmatprep.subr.mxu0 0.0
        %1433 = vmatpush2.msra.mxu0 0.0
        %1434 = vmatprep.subr.mxu0 0.0
        %1435 = vmatpush2.msra.mxu0 0.0
        %1436 = vmatprep.subr.mxu0 0.0
        %1437 = vmatpush2.msra.mxu0 0.0
        %1438 = vmatprep.subr.mxu0 0.0
        %1439 = vmatpush2.msra.mxu0 0.0
        %1440 = vmatprep.mubr.f32.mxu0 0.0
        %1441 = vmatmul.mubr.f32.gmra.mxu0 %v1374
        %v1442 = vpop.f32.mrf.mxu0
        %v1443 = vadd.f32 0.0, %v1442
        %v1444 = vpop.f32.mrf.mxu0
        %1445 = vdwg.mxu0
        %v1446 = vmul.f32 %v1443, %v1443
        %v1447 = vsel %vm752, %v1446, 0.0
        %1448 = vadd.xlane.f32.xlu0 %v1447
        %v1449 = vpop.xlane.xlu0 %1448
        %v1450 = vmul.f32 %v1449, %v914
        %v1451 = vadd.f32 %v1450, 1e-06
        %v1452 = vrsqrt.pop %v1451
        %v1453 = vmul.f32 %v1443, %v1452
        %1455 = vrot.lane.b32.xlu0 %v1453, 24
        %v1456 = vpop.permute.xlu0 %1455
        %v1458 = vmul.f32 %v925, %v1456
        %v1459 = vsel %vm752, %v926, %v1104
        %vm1460 = vcmask 130048
        %v1461 = vsel %vm1460, %v1459, %v1281
        %vm1462 = vcmask 195584
        %v1463 = vsel %vm1462, %v1461, %v1458
        %v1464 = vld [vmem:[#allocation14] sm:$0xff]
        %v1465 = vld [vmem:[#allocation14 + $0x8] sm:$0xff]
        %v1466 = vld [vmem:[#allocation14 + $0x10] sm:$0xff]
        %v1467 = vld [vmem:[#allocation14 + $0x18] sm:$0xff]
        %v1469 = vsel %vm452, %v1463, 0
        %1471 = vmatprep.subr.mxu0 0.0
        %1472 = vmatpush1.msra.mxu0 0.0
        %1473 = vmatprep.subr.mxu0 0.0
        %1474 = vmatpush1.msra.mxu0 0.0
        %1475 = vmatprep.subr.mxu0 0.0
        %1476 = vmatpush1.msra.mxu0 0.0
        %1477 = vmatprep.subr.mxu0 0.0
        %1478 = vmatpush1.msra.mxu0 0.0
        %1479 = vmatprep.subr.mxu0 0.0
        %1480 = vmatpush1.msra.mxu0 0.0
        %1481 = vmatprep.subr.mxu0 0.0
        %1482 = vmatpush1.msra.mxu0 0.0
        %1483 = vmatprep.subr.mxu0 0.0
        %1484 = vmatpush1.msra.mxu0 0.0
        %1485 = vmatprep.subr.mxu0 0.0
        %1486 = vmatpush1.msra.mxu0 0.0
        %1487 = vmatprep.subr.mxu0 0.0
        %1488 = vmatpush1.msra.mxu0 0.0
        %1489 = vmatprep.subr.mxu0 0.0
        %1490 = vmatpush1.msra.mxu0 0.0
        %1491 = vmatprep.subr.mxu0 0.0
        %1492 = vmatpush1.msra.mxu0 0.0
        %1493 = vmatprep.subr.mxu0 0.0
        %1494 = vmatpush1.msra.mxu0 0.0
        %1495 = vmatprep.subr.mxu0 0.0
        %1496 = vmatpush1.msra.mxu0 %v1467
        %1497 = vmatprep.subr.mxu0 0.0
        %1498 = vmatpush1.msra.mxu0 %v1466
        %1499 = vmatprep.subr.mxu0 0.0
        %1500 = vmatpush1.msra.mxu0 %v1465
        %1501 = vmatprep.subr.mxu0 0.0
        %1502 = vmatpush1.msra.mxu0 %v1464
        %1503 = vmatprep.subr.mxu0 0.0
        %1504 = vmatpush2.msra.mxu0 0.0
        %1505 = vmatprep.subr.mxu0 0.0
        %1506 = vmatpush2.msra.mxu0 0.0
        %1507 = vmatprep.subr.mxu0 0.0
        %1508 = vmatpush2.msra.mxu0 0.0
        %1509 = vmatprep.subr.mxu0 0.0
        %1510 = vmatpush2.msra.mxu0 0.0
        %1511 = vmatprep.subr.mxu0 0.0
        %1512 = vmatpush2.msra.mxu0 0.0
        %1513 = vmatprep.subr.mxu0 0.0
        %1514 = vmatpush2.msra.mxu0 0.0
        %1515 = vmatprep.subr.mxu0 0.0
        %1516 = vmatpush2.msra.mxu0 0.0
        %1517 = vmatprep.subr.mxu0 0.0
        %1518 = vmatpush2.msra.mxu0 0.0
        %1519 = vmatprep.subr.mxu0 0.0
        %1520 = vmatpush2.msra.mxu0 0.0
        %1521 = vmatprep.subr.mxu0 0.0
        %1522 = vmatpush2.msra.mxu0 0.0
        %1523 = vmatprep.subr.mxu0 0.0
        %1524 = vmatpush2.msra.mxu0 0.0
        %1525 = vmatprep.subr.mxu0 0.0
        %1526 = vmatpush2.msra.mxu0 0.0
        %1527 = vmatprep.subr.mxu0 0.0
        %1528 = vmatpush2.msra.mxu0 0.0
        %1529 = vmatprep.subr.mxu0 0.0
        %1530 = vmatpush2.msra.mxu0 0.0
        %1531 = vmatprep.subr.mxu0 0.0
        %1532 = vmatpush2.msra.mxu0 0.0
        %1533 = vmatprep.subr.mxu0 0.0
        %1534 = vmatpush2.msra.mxu0 0.0
        %1535 = vmatprep.mubr.f32.mxu0 0.0
        %1536 = vmatmul.mubr.f32.gmra.mxu0 %v1469
        %v1537 = vpop.f32.mrf.mxu0
        %v1538 = vadd.f32 0.0, %v1537
        %v1539 = vpop.f32.mrf.mxu0
        %1540 = vdwg.mxu0
        %1541 = vst.msk [vmem:[%s444] sm:$0xff] %vm452, %v1538
        %s1542 = sand.u32 %s217, 1
        %s1543 = scalar_lea.sflag [#allocation4], %s1542
        %s1544 = sand.u32 %s217, 1
        %s1545 = smul.addr %s1544, 8
        %s1546 = scalar_lea.vmem [#allocation16], %s1545
        // Predicated region
        $region85: #{tpu_custom_call.1} parent=51 // pred_check
          %p1547 = pneg %p227
        $region86: #{tpu_custom_call.1} parent=51 // pred_check_branch
          %1549 = sbr.rel (%p1547) target = $region88
        $region87: #{tpu_custom_call.1} parent=51 // pred_region
          %s1551 = ssub.s32 128, 128
          %1552 = vsyncadd %s1543, %s1551
          %s1553 = smul.addr %s31, 128
          %s1554 = scalar_lea.hbm %s8, %s1553
          %s1556 = sshll.u32 %s1546, 4
          %s1557 = int_to_ptr.vmem [resolvable:$true] %s1556
          %1559 = dma.vmem_to_hbm [thread:$0]  %s1557, 128, %s1554, %s1543
        $region88: #{tpu_custom_call.1} parent=51 // pred_fallthru
          _
      $region52: #{tpu_custom_call.1} parent=5 // pred_fallthru
        _
      %p1560 = scmp.le.s32.totalorder 2, %s26
      // Predicated region
      $region89: #{tpu_custom_call.1} parent=5 // pred_check
        %p1561 = pneg %p1560
      $region90: #{tpu_custom_call.1} parent=5 // pred_check_branch
        %1563 = sbr.rel (%p1561) target = $region92
      $region91: #{tpu_custom_call.1} parent=5 // pred_region
        %s1564 = ssub.s32 %s26, 2
        // Predicated region
        $region93: #{tpu_custom_call.1} parent=91 // pred_check
          %p1565 = pneg %p233
        $region94: #{tpu_custom_call.1} parent=91 // pred_check_branch
          %1567 = sbr.rel (%p1565) target = $region96
        $region95: #{tpu_custom_call.1} parent=91 // pred_region
          %s1568 = sand.u32 %s218, 1
          %s1569 = scalar_lea.sflag [#allocation4], %s1568
          %s1570 = sand.u32 %s218, 1
          %s1571 = smul.addr %s1570, 8
          %s1572 = scalar_lea.vmem [#allocation16], %s1571
          %1573 = dma.done %s1569, 128
        $region96: #{tpu_custom_call.1} parent=91 // pred_fallthru
          _
      $region92: #{tpu_custom_call.1} parent=5 // pred_fallthru
        _
    $region6: #{tpu_custom_call.1} parent=1 // loop_footer
      %s30 = sadd.s32 1, %s26
    $region7: #{tpu_custom_call.1} parent=1 // loop_footer_branch
      %25 = sbr.rel target = $region3
    $region8: #{tpu_custom_call.1} parent=1 // loop_exit
      _
    %1574 = vsyncpa [#allocation3], 1
    %s1575 = scalar_lea.sflag [#allocation3], 1
    %1576 = vsyncpa %s1575, 1
    %1577 = vsyncpa [#allocation6], 1
    %s1578 = scalar_lea.sflag [#allocation6], 1
    %1579 = vsyncpa %s1578, 1
    %1580 = vsyncpa [#allocation9], 1
    %1581 = vsyncpa [#allocation12], 1
    %1582 = vsyncpa [#allocation15], 1
    %1583 = vsyncpa [#allocation4], 1
    %s1584 = scalar_lea.sflag [#allocation4], 1
    %1585 = vsyncpa %s1584, 1

</llo_original>
